<compile_context>
chip_gen: v7x
topology: tpu7x:2x2x1
jax: 0.10.0
libtpu: 0.0.40
codegen_flags: <defaults>
</compile_context>

<pallas_src>
import jax
import jax.numpy as jnp
from jax.experimental import pallas as pl
from jax.experimental.pallas import tpu as pltpu

EPS = 1e-5  # nn.BatchNorm1d default eps


# ----------------------------------------------------------------------------
# Kernel 1: fused projection
#   f1  = ReLU(norm1(fc1(x)))                      (fc1 bias=False)
#   qkv = max((f1 @ [Wq|Wk|Wv]) * scale + shift, lo)   (ReLU only on q,k cols)
#   cp  = coord @ Wp1                              (linear_p_bias first layer)
# ----------------------------------------------------------------------------
def _proj_kernel(feat_ref, coord_ref, wfc1_ref, s1_ref, h1_ref,
                 wqkv_ref, sqkv_ref, hqkv_ref, lo_ref, wp1_ref,
                 q_ref, k_ref, v_ref, cp_ref):
    C = q_ref.shape[-1]
    x = feat_ref[...]
    f1 = jnp.dot(x, wfc1_ref[...], preferred_element_type=jnp.float32)
    f1 = jnp.maximum(f1 * s1_ref[...] + h1_ref[...], 0.0)

    y = jnp.dot(f1, wqkv_ref[...], preferred_element_type=jnp.float32)
    y = jnp.maximum(y * sqkv_ref[...] + hqkv_ref[...], lo_ref[...])
    q_ref[...] = y[:, 0:C]
    k_ref[...] = y[:, C:2 * C]
    v_ref[...] = y[:, 2 * C:3 * C]

    co = coord_ref[...]                         # (tile, 3)
    wp1 = wp1_ref[...]                          # (3, C)
    cp_ref[...] = (co[:, 0:1] * wp1[0:1, :]
                   + co[:, 1:2] * wp1[1:2, :]
                   + co[:, 2:3] * wp1[2:3, :])


def fused_projection(feat, coord, w_fc1, s1, h1, w_qkv, s_qkv, h_qkv, lo, w_p1,
                     *, tile=256):
    N, C = feat.shape
    C3 = w_qkv.shape[1]

    def full(shape):
        return pl.BlockSpec(shape, lambda i: (0,) * len(shape))

    return pl.pallas_call(
        _proj_kernel,
        out_shape=tuple(jax.ShapeDtypeStruct((N, C), jnp.float32)
                        for _ in range(4)),
        grid=(N // tile,),
        in_specs=[
            pl.BlockSpec((tile, C), lambda i: (i, 0)),      # feat
            pl.BlockSpec((tile, 3), lambda i: (i, 0)),      # coord
            full((C, C)), full((1, C)), full((1, C)),        # fc1 + norm1
            full((C, C3)), full((1, C3)), full((1, C3)), full((1, C3)),  # qkv
            full((3, C)),                                    # Wp1
        ],
        out_specs=tuple(pl.BlockSpec((tile, C), lambda i: (i, 0))
                        for _ in range(4)),
        compiler_params=pltpu.CompilerParams(
            dimension_semantics=("parallel",)),
    )(feat, coord, w_fc1, s1.reshape(1, C), h1.reshape(1, C),
      w_qkv, s_qkv.reshape(1, C3), h_qkv.reshape(1, C3), lo.reshape(1, C3),
      w_p1)


# ----------------------------------------------------------------------------
# Kernel 2: GroupedVectorAttention core (gather done in-kernel)
#   one-hot MXU gather of k/v/cp -> pe-bias MLP -> relation_qk ->
#   weight_encoding (second layer pre-expanded to lane-dense (G,C)) ->
#   softmax over neighbors -> mask -> grouped aggregation ->
#   Block.norm2 + ReLU folded into the epilogue.
# ----------------------------------------------------------------------------
def _gva_kernel(q_ref, cpc_ref, idx_ref, k_ref, v_ref, cp_ref,
                wp2_ref, bp2_ref, p1s_ref, p1h_ref,
                ww1_ref, w1s_ref, w1h_ref, ww2e_ref, bw2e_ref,
                bn2s_ref, bn2h_ref, o_ref):
    T, S = idx_ref.shape
    C = q_ref.shape[-1]
    Np = k_ref.shape[0]

    idx = idx_ref[...]                                   # (T, S) int32
    mask = (idx >= 0).astype(jnp.float32)                # (T, S)
    idxc = jnp.maximum(idx, 0).reshape(T * S, 1)
    cols = jax.lax.broadcasted_iota(jnp.int32, (T * S, Np), 1)
    onehot = (cols == idxc).astype(jnp.float32)          # (T*S, Np)

    # Gather rows of the VMEM-resident tables on the MXU (exact selection).
    keyg = jnp.dot(onehot, k_ref[...], preferred_element_type=jnp.float32)
    valg = jnp.dot(onehot, v_ref[...], preferred_element_type=jnp.float32)
    cpg = jnp.dot(onehot, cp_ref[...], preferred_element_type=jnp.float32)

    q = q_ref[...]                                       # (T, C)
    cpc = cpc_ref[...]                                   # (T, C)

    keyg = keyg.reshape(T, S, C)
    valg = valg.reshape(T, S, C)
    cpg = cpg.reshape(T, S, C)

    # linear_p_bias: ReLU(BN(pos @ Wp1 + b1)) with pos@Wp1 = cp[idx] - cp[n].
    h = jnp.maximum((cpg - cpc[:, None, :]) * p1s_ref[...] + p1h_ref[...], 0.0)
    peb = jnp.dot(h.reshape(T * S, C), wp2_ref[...],
                  preferred_element_type=jnp.float32) + bp2_ref[...]
    peb = peb.reshape(T, S, C)

    rel = keyg - q[:, None, :] + peb                     # relation_qk + pe bias
    val = valg + peb                                     # value + pe bias

    # weight_encoding: Linear(C->G)+BN+ReLU, then Linear(G->G) pre-expanded
    # to (G, C) so everything downstream stays lane-dense.
    wh = jnp.dot(rel.reshape(T * S, C), ww1_ref[...],
                 preferred_element_type=jnp.float32)
    wh = jnp.maximum(wh * w1s_ref[...] + w1h_ref[...], 0.0)       # (T*S, G)
    w = jnp.dot(wh, ww2e_ref[...],
                preferred_element_type=jnp.float32) + bw2e_ref[...]
    w = w.reshape(T, S, C)

    # softmax over the neighbor axis (nn.Softmax(dim=1)), then mask the pads.
    m = jnp.max(w, axis=1, keepdims=True)
    e = jnp.exp(w - m)
    denom = jnp.sum(e, axis=1, keepdims=True)
    w = e * pl.reciprocal(denom, approx=True)
    w = w * mask[:, :, None]

    # grouped aggregation (weights already expanded per-channel).
    out = jnp.sum(val * w, axis=1)                       # (T, C)

    # Block.norm2 + ReLU folded into the epilogue.
    o_ref[...] = jnp.maximum(out * bn2s_ref[...] + bn2h_ref[...], 0.0)


def gva_attention(q, cpc, idx, k_tab, v_tab, cp_tab,
                  wp2, bp2, p1s, p1h, ww1, w1s, w1h, ww2e, bw2e, bn2s, bn2h,
                  *, tile=128):
    N, C = q.shape
    S = idx.shape[1]
    G = ww1.shape[1]

    def full(shape):
        return pl.BlockSpec(shape, lambda i: (0,) * len(shape))

    return pl.pallas_call(
        _gva_kernel,
        out_shape=jax.ShapeDtypeStruct((N, C), jnp.float32),
        grid=(N // tile,),
        in_specs=[
            pl.BlockSpec((tile, C), lambda i: (i, 0)),   # q (center)
            pl.BlockSpec((tile, C), lambda i: (i, 0)),   # cp (center)
            pl.BlockSpec((tile, S), lambda i: (i, 0)),   # reference_index tile
            full((N, C)), full((N, C)), full((N, C)),    # k/v/cp gather tables
            full((C, C)), full((1, C)),                  # Wp2, b_p2
            full((1, C)), full((1, C)),                  # p1 folded scale/shift
            full((C, G)), full((1, G)), full((1, G)),    # Ww1 + folded BN
            full((G, C)), full((1, C)),                  # Ww2 expanded (+bias)
            full((1, C)), full((1, C)),                  # norm2 affine
        ],
        out_specs=pl.BlockSpec((tile, C), lambda i: (i, 0)),
        compiler_params=pltpu.CompilerParams(
            dimension_semantics=("parallel",),
            vmem_limit_bytes=64 * 1024 * 1024),          # v7x-safe budget
    )(q, cpc, idx, k_tab, v_tab, cp_tab,
      wp2, bp2.reshape(1, C), p1s.reshape(1, C), p1h.reshape(1, C),
      ww1, w1s.reshape(1, G), w1h.reshape(1, G),
      ww2e, bw2e.reshape(1, C),
      bn2s.reshape(1, C), bn2h.reshape(1, C))


# ----------------------------------------------------------------------------
# Kernel 3: y = ReLU(residual + (x @ W_fc3) * scale + shift)
# (fc3 + norm3 + residual + final ReLU of Block; drop_path = identity.)
# ----------------------------------------------------------------------------
def _fc3_residual_kernel(x_ref, w_ref, scale_ref, shift_ref, res_ref, o_ref):
    y = jnp.dot(x_ref[...], w_ref[...], preferred_element_type=jnp.float32)
    y = y * scale_ref[...] + shift_ref[...]
    o_ref[...] = jnp.maximum(res_ref[...] + y, 0.0)


def fc3_residual_relu(x, w, scale, shift, residual, *, tile=256):
    N, cin = x.shape
    cout = w.shape[1]
    return pl.pallas_call(
        _fc3_residual_kernel,
        out_shape=jax.ShapeDtypeStruct((N, cout), jnp.float32),
        grid=(N // tile,),
        in_specs=[
            pl.BlockSpec((tile, cin), lambda i: (i, 0)),
            pl.BlockSpec((cin, cout), lambda i: (0, 0)),
            pl.BlockSpec((1, cout), lambda i: (0, 0)),
            pl.BlockSpec((1, cout), lambda i: (0, 0)),
            pl.BlockSpec((tile, cout), lambda i: (i, 0)),
        ],
        out_specs=pl.BlockSpec((tile, cout), lambda i: (i, 0)),
        compiler_params=pltpu.CompilerParams(dimension_semantics=("parallel",)),
    )(x, w, scale.reshape(1, cout), shift.reshape(1, cout), residual)


# ----------------------------------------------------------------------------
# Parameter init & eval-mode BN folding
# ----------------------------------------------------------------------------
def fold_bn(gamma, beta, bias=None):
    """Fold eval-mode BN (mean=0, var=1) + optional preceding Linear bias into
    a per-channel (scale, shift): y = x*scale + shift."""
    scale = gamma / jnp.sqrt(1.0 + EPS)
    shift = beta if bias is None else bias * scale + beta
    return scale, shift


def init_params(key, C, G):
    ks = iter(jax.random.split(key, 32))

    def rnd(shape, scale=0.1):
        return (jax.random.normal(next(ks), shape) * scale).astype(jnp.float32)

    p = {}
    p["w_fc1"] = rnd((C, C))
    p["g1"], p["beta1"] = 1.0 + rnd((C,), 0.05), rnd((C,), 0.05)
    p["w_q"], p["b_q"] = rnd((C, C)), rnd((C,), 0.05)
    p["g_q"], p["beta_q"] = 1.0 + rnd((C,), 0.05), rnd((C,), 0.05)
    p["w_k"], p["b_k"] = rnd((C, C)), rnd((C,), 0.05)
    p["g_k"], p["beta_k"] = 1.0 + rnd((C,), 0.05), rnd((C,), 0.05)
    p["w_v"], p["b_v"] = rnd((C, C)), rnd((C,), 0.05)
    p["w_p1"], p["b_p1"] = rnd((3, C)), rnd((C,), 0.05)
    p["g_p"], p["beta_p"] = 1.0 + rnd((C,), 0.05), rnd((C,), 0.05)
    p["w_p2"], p["b_p2"] = rnd((C, C)), rnd((C,), 0.05)
    p["w_w1"], p["b_w1"] = rnd((C, G)), rnd((G,), 0.05)
    p["g_w"], p["beta_w"] = 1.0 + rnd((G,), 0.05), rnd((G,), 0.05)
    p["w_w2"], p["b_w2"] = rnd((G, G), 0.3), rnd((G,), 0.05)
    p["g2"], p["beta2"] = 1.0 + rnd((C,), 0.05), rnd((C,), 0.05)
    p["w_fc3"] = rnd((C, C))
    p["g3"], p["beta3"] = 1.0 + rnd((C,), 0.05), rnd((C,), 0.05)
    return p


# ----------------------------------------------------------------------------
# Block.forward — Pallas version
# ----------------------------------------------------------------------------
def block_forward(params, coord, feat, offset, reference_index, groups,
                  tile_proj=256, tile_attn=128):
    p = params
    N, C = feat.shape
    G = groups
    assert C % G == 0, "embed_channels must be divisible by groups"
    assert tile_proj % tile_attn == 0
    ci = C // G

    # Pad the point axis so every kernel's grid covers N exactly.
    n_align = tile_proj
    n_pad = (-N) % n_align
    feat_p = jnp.pad(feat, ((0, n_pad), (0, 0)))
    coord_p = jnp.pad(coord, ((0, n_pad), (0, 0)))
    idx_p = jnp.pad(reference_index, ((0, n_pad), (0, 0)), constant_values=-1)

    # --- fused fc1/norm1/ReLU + q/k/v + coord projection ---------------------
    sc1, sh1 = fold_bn(p["g1"], p["beta1"])
    scq, shq = fold_bn(p["g_q"], p["beta_q"], bias=p["b_q"])
    sck, shk = fold_bn(p["g_k"], p["beta_k"], bias=p["b_k"])
    w_qkv = jnp.concatenate([p["w_q"], p["w_k"], p["w_v"]], axis=1)
    s_qkv = jnp.concatenate([scq, sck, jnp.ones((C,), jnp.float32)])
    h_qkv = jnp.concatenate([shq, shk, p["b_v"]])
    lo_qkv = jnp.concatenate([jnp.zeros((2 * C,), jnp.float32),
                              jnp.full((C,), -1e30, jnp.float32)])

    q, k, v, cp = fused_projection(feat_p, coord_p, p["w_fc1"], sc1, sh1,
                                   w_qkv, s_qkv, h_qkv, lo_qkv, p["w_p1"],
                                   tile=tile_proj)

    # --- grouped vector attention (gather happens inside the kernel) ---------
    scp1, shp1 = fold_bn(p["g_p"], p["beta_p"], bias=p["b_p1"])
    scw1, shw1 = fold_bn(p["g_w"], p["beta_w"], bias=p["b_w1"])
    sc2, sh2 = fold_bn(p["g2"], p["beta2"])
    # Expand the (G,G) second weight-encoding layer to (G,C) / (C,) — exact
    # column replication, keeps softmax/aggregation lane-dense in the kernel.
    ww2e = jnp.repeat(p["w_w2"], ci, axis=1)
    bw2e = jnp.repeat(p["b_w2"], ci)

    feat2 = gva_attention(q, cp, idx_p, k, v, cp,
                          p["w_p2"], p["b_p2"], scp1, shp1,
                          p["w_w1"], scw1, shw1, ww2e, bw2e,
                          sc2, sh2, tile=tile_attn)

    # --- fc3 + norm3 + residual + ReLU ---------------------------------------
    sc3, sh3 = fold_bn(p["g3"], p["beta3"])
    feat_out_p = fc3_residual_relu(feat2, p["w_fc3"], sc3, sh3, feat_p,
                                   tile=tile_proj)
    feat_out = feat_out_p[:N]
    return [coord, feat_out, offset]


# ----------------------------------------------------------------------------
# Pure-JAX reference for verification
# ----------------------------------------------------------------------------
def ref_block_forward(params, coord, feat, offset, reference_index, groups):
    p = params
    hp = jax.lax.Precision.HIGHEST
    C = feat.shape[1]
    relu = lambda x: jnp.maximum(x, 0.0)
    bn = lambda x, g, b: x * (g / jnp.sqrt(1.0 + EPS)) + b

    identity = feat
    feat1 = relu(bn(jnp.dot(feat, p["w_fc1"], precision=hp), p["g1"], p["beta1"]))
    q = relu(bn(jnp.dot(feat1, p["w_q"], precision=hp) + p["b_q"], p["g_q"], p["beta_q"]))
    k = relu(bn(jnp.dot(feat1, p["w_k"], precision=hp) + p["b_k"], p["g_k"], p["beta_k"]))
    v = jnp.dot(feat1, p["w_v"], precision=hp) + p["b_v"]

    idx = jnp.maximum(reference_index, 0)
    mask = jnp.sign(reference_index + 1).astype(jnp.float32)
    pos = coord[idx] - coord[:, None, :]
    key_g, val_g = k[idx], v[idx]

    ph = relu(bn(jnp.einsum("nsd,dc->nsc", pos, p["w_p1"], precision=hp) + p["b_p1"],
                 p["g_p"], p["beta_p"]))
    peb = jnp.einsum("nsc,cd->nsd", ph, p["w_p2"], precision=hp) + p["b_p2"]

    rel = key_g - q[:, None, :] + peb
    val = val_g + peb

    wh = relu(bn(jnp.einsum("nsc,cg->nsg", rel, p["w_w1"], precision=hp) + p["b_w1"],
                 p["g_w"], p["beta_w"]))
    w = jnp.einsum("nsg,gh->nsh", wh, p["w_w2"], precision=hp) + p["b_w2"]
    w = jax.nn.softmax(w, axis=1) * mask[:, :, None]

    N, S, _ = val.shape
    val4 = val.reshape(N, S, groups, C // groups)
    attn = jnp.einsum("nsgi,nsg->ngi", val4, w, precision=hp).reshape(N, C)

    feat2 = relu(bn(attn, p["g2"], p["beta2"]))
    feat3 = bn(jnp.dot(feat2, p["w_fc3"], precision=hp), p["g3"], p["beta3"])
    return relu(identity + feat3)


# ----------------------------------------------------------------------------
if __name__ == "__main__":
    N, C, G, S = 256, 64, 8, 16        # points, embed_channels, groups, nbrs

    key = jax.random.PRNGKey(0)
    k_feat, k_coord, k_idx, k_valid, k_par = jax.random.split(key, 5)

    feat = jax.random.normal(k_feat, (N, C), dtype=jnp.float32)
    coord = jax.random.uniform(k_coord, (N, 3), dtype=jnp.float32)
    ridx = jax.random.randint(k_idx, (N, S), 0, N, dtype=jnp.int32)
    valid = jax.random.bernoulli(k_valid, 0.8, (N, S))
    reference_index = jnp.where(valid, ridx, -1).astype(jnp.int32)
    reference_index = reference_index.at[:, 0].set(jnp.arange(N, dtype=jnp.int32))
    offset = jnp.array([N // 2, N], dtype=jnp.int32)

    params = init_params(k_par, C, G)

    coord_out, feat_out, offset_out = block_forward(
        params, coord, feat, offset, reference_index, G)
    feat_out = jax.block_until_ready(feat_out)

    feat_ref = ref_block_forward(params, coord, feat, offset, reference_index, G)
    err = float(jnp.max(jnp.abs(feat_out - feat_ref)))
    assert jnp.allclose(feat_out, feat_ref, atol=2e-3, rtol=2e-3), f"max err {err}"

    print("KERNEL_OK")
</pallas_src>

<mosaic_0001>
module attributes {stable_mosaic.version = 11 : i64} {
  func.func @_proj_kernel(%arg0: i32, %arg1: memref<256x64xf32, #tpu.memory_space<vmem>>, %arg2: memref<256x3xf32, #tpu.memory_space<vmem>>, %arg3: memref<64x64xf32, #tpu.memory_space<vmem>>, %arg4: memref<1x64xf32, #tpu.memory_space<vmem>>, %arg5: memref<1x64xf32, #tpu.memory_space<vmem>>, %arg6: memref<64x192xf32, #tpu.memory_space<vmem>>, %arg7: memref<1x192xf32, #tpu.memory_space<vmem>>, %arg8: memref<1x192xf32, #tpu.memory_space<vmem>>, %arg9: memref<1x192xf32, #tpu.memory_space<vmem>>, %arg10: memref<3x64xf32, #tpu.memory_space<vmem>>, %arg11: memref<256x64xf32, #tpu.memory_space<vmem>>, %arg12: memref<256x64xf32, #tpu.memory_space<vmem>>, %arg13: memref<256x64xf32, #tpu.memory_space<vmem>>, %arg14: memref<256x64xf32, #tpu.memory_space<vmem>>) attributes {dimension_semantics = [#tpu.dimension_semantics<parallel>], iteration_bounds = array<i64: 1>, scalar_prefetch = 0 : i64, scratch_operands = 0 : i64, tpu.core_type = #tpu.core_type<tc>, window_params = [{transform_indices = @transform_0, window_bounds = array<i64: 256, 64>}, {transform_indices = @transform_1, window_bounds = array<i64: 256, 3>}, {pipeline_mode = #tpu.pipeline_mode<synchronous>, transform_indices = @transform_2, window_bounds = array<i64: 64, 64>}, {pipeline_mode = #tpu.pipeline_mode<synchronous>, transform_indices = @transform_3, window_bounds = array<i64: 1, 64>}, {pipeline_mode = #tpu.pipeline_mode<synchronous>, transform_indices = @transform_4, window_bounds = array<i64: 1, 64>}, {pipeline_mode = #tpu.pipeline_mode<synchronous>, transform_indices = @transform_5, window_bounds = array<i64: 64, 192>}, {pipeline_mode = #tpu.pipeline_mode<synchronous>, transform_indices = @transform_6, window_bounds = array<i64: 1, 192>}, {pipeline_mode = #tpu.pipeline_mode<synchronous>, transform_indices = @transform_7, window_bounds = array<i64: 1, 192>}, {pipeline_mode = #tpu.pipeline_mode<synchronous>, transform_indices = @transform_8, window_bounds = array<i64: 1, 192>}, {pipeline_mode = #tpu.pipeline_mode<synchronous>, transform_indices = @transform_9, window_bounds = array<i64: 3, 64>}, {transform_indices = @transform_10, window_bounds = array<i64: 256, 64>}, {transform_indices = @transform_11, window_bounds = array<i64: 256, 64>}, {transform_indices = @transform_12, window_bounds = array<i64: 256, 64>}, {transform_indices = @transform_13, window_bounds = array<i64: 256, 64>}]} {
    %c0 = arith.constant 0 : index
    %c0_0 = arith.constant 0 : index
    %0 = vector.load %arg1[%c0, %c0_0] : memref<256x64xf32, #tpu.memory_space<vmem>>, vector<256x64xf32>
    %c0_1 = arith.constant 0 : index
    %c0_2 = arith.constant 0 : index
    %1 = vector.load %arg3[%c0_1, %c0_2] : memref<64x64xf32, #tpu.memory_space<vmem>>, vector<64x64xf32>
    %cst = arith.constant dense<0.000000e+00> : vector<256x64xf32>
    %2 = tpu.matmul %0, %1, %cst {dimension_numbers = #tpu.dot_dimension_numbers<[1], [0], [0], [1], [0, 0, 1, 1], [], []>} : vector<256x64xf32>, vector<64x64xf32>, vector<256x64xf32> -> vector<256x64xf32>
    %c0_3 = arith.constant 0 : index
    %c0_4 = arith.constant 0 : index
    %3 = vector.load %arg4[%c0_3, %c0_4] : memref<1x64xf32, #tpu.memory_space<vmem>>, vector<1x64xf32>
    %4 = vector.broadcast %3 : vector<1x64xf32> to vector<256x64xf32>
    %5 = arith.mulf %2, %4 : vector<256x64xf32>
    %c0_5 = arith.constant 0 : index
    %c0_6 = arith.constant 0 : index
    %6 = vector.load %arg5[%c0_5, %c0_6] : memref<1x64xf32, #tpu.memory_space<vmem>>, vector<1x64xf32>
    %7 = vector.broadcast %6 : vector<1x64xf32> to vector<256x64xf32>
    %8 = arith.addf %5, %7 : vector<256x64xf32>
    %cst_7 = arith.constant 0.000000e+00 : f32
    %9 = vector.broadcast %cst_7 : f32 to vector<256x64xf32>
    %10 = arith.maximumf %8, %9 : vector<256x64xf32>
    %c0_8 = arith.constant 0 : index
    %c0_9 = arith.constant 0 : index
    %11 = vector.load %arg6[%c0_8, %c0_9] : memref<64x192xf32, #tpu.memory_space<vmem>>, vector<64x192xf32>
    %cst_10 = arith.constant dense<0.000000e+00> : vector<256x192xf32>
    %12 = tpu.matmul %10, %11, %cst_10 {dimension_numbers = #tpu.dot_dimension_numbers<[1], [0], [0], [1], [0, 0, 1, 1], [], []>} : vector<256x64xf32>, vector<64x192xf32>, vector<256x192xf32> -> vector<256x192xf32>
    %c0_11 = arith.constant 0 : index
    %c0_12 = arith.constant 0 : index
    %13 = vector.load %arg7[%c0_11, %c0_12] : memref<1x192xf32, #tpu.memory_space<vmem>>, vector<1x192xf32>
    %14 = vector.broadcast %13 : vector<1x192xf32> to vector<256x192xf32>
    %15 = arith.mulf %12, %14 : vector<256x192xf32>
    %c0_13 = arith.constant 0 : index
    %c0_14 = arith.constant 0 : index
    %16 = vector.load %arg8[%c0_13, %c0_14] : memref<1x192xf32, #tpu.memory_space<vmem>>, vector<1x192xf32>
    %17 = vector.broadcast %16 : vector<1x192xf32> to vector<256x192xf32>
    %18 = arith.addf %15, %17 : vector<256x192xf32>
    %c0_15 = arith.constant 0 : index
    %c0_16 = arith.constant 0 : index
    %19 = vector.load %arg9[%c0_15, %c0_16] : memref<1x192xf32, #tpu.memory_space<vmem>>, vector<1x192xf32>
    %20 = vector.broadcast %19 : vector<1x192xf32> to vector<256x192xf32>
    %21 = arith.maximumf %18, %20 : vector<256x192xf32>
    %22 = vector.extract_strided_slice %21 {offsets = [0, 0], sizes = [256, 64], strides = [1, 1]} : vector<256x192xf32> to vector<256x64xf32>
    %c0_17 = arith.constant 0 : index
    %c0_18 = arith.constant 0 : index
    %23 = vector.load %arg11[%c0_17, %c0_18] : memref<256x64xf32, #tpu.memory_space<vmem>>, vector<256x64xf32>
    tpu.vector_store %arg11[%c0_17, %c0_18], %22 {strides = array<i32>} : memref<256x64xf32, #tpu.memory_space<vmem>>, vector<256x64xf32>,
    %24 = vector.extract_strided_slice %21 {offsets = [0, 64], sizes = [256, 64], strides = [1, 1]} : vector<256x192xf32> to vector<256x64xf32>
    %c0_19 = arith.constant 0 : index
    %c0_20 = arith.constant 0 : index
    %25 = vector.load %arg12[%c0_19, %c0_20] : memref<256x64xf32, #tpu.memory_space<vmem>>, vector<256x64xf32>
    tpu.vector_store %arg12[%c0_19, %c0_20], %24 {strides = array<i32>} : memref<256x64xf32, #tpu.memory_space<vmem>>, vector<256x64xf32>,
    %26 = vector.extract_strided_slice %21 {offsets = [0, 128], sizes = [256, 64], strides = [1, 1]} : vector<256x192xf32> to vector<256x64xf32>
    %c0_21 = arith.constant 0 : index
    %c0_22 = arith.constant 0 : index
    %27 = vector.load %arg13[%c0_21, %c0_22] : memref<256x64xf32, #tpu.memory_space<vmem>>, vector<256x64xf32>
    tpu.vector_store %arg13[%c0_21, %c0_22], %26 {strides = array<i32>} : memref<256x64xf32, #tpu.memory_space<vmem>>, vector<256x64xf32>,
    %c0_23 = arith.constant 0 : index
    %c0_24 = arith.constant 0 : index
    %28 = vector.load %arg2[%c0_23, %c0_24] : memref<256x3xf32, #tpu.memory_space<vmem>>, vector<256x3xf32>
    %c0_25 = arith.constant 0 : index
    %c0_26 = arith.constant 0 : index
    %29 = vector.load %arg10[%c0_25, %c0_26] : memref<3x64xf32, #tpu.memory_space<vmem>>, vector<3x64xf32>
    %30 = vector.extract_strided_slice %28 {offsets = [0, 0], sizes = [256, 1], strides = [1, 1]} : vector<256x3xf32> to vector<256x1xf32>
    %31 = vector.extract_strided_slice %29 {offsets = [0, 0], sizes = [1, 64], strides = [1, 1]} : vector<3x64xf32> to vector<1x64xf32>
    %32 = vector.broadcast %30 : vector<256x1xf32> to vector<256x64xf32>
    %33 = vector.broadcast %31 : vector<1x64xf32> to vector<256x64xf32>
    %34 = arith.mulf %32, %33 : vector<256x64xf32>
    %35 = vector.extract_strided_slice %28 {offsets = [0, 1], sizes = [256, 1], strides = [1, 1]} : vector<256x3xf32> to vector<256x1xf32>
    %36 = vector.extract_strided_slice %29 {offsets = [1, 0], sizes = [1, 64], strides = [1, 1]} : vector<3x64xf32> to vector<1x64xf32>
    %37 = vector.broadcast %35 : vector<256x1xf32> to vector<256x64xf32>
    %38 = vector.broadcast %36 : vector<1x64xf32> to vector<256x64xf32>
    %39 = arith.mulf %37, %38 : vector<256x64xf32>
    %40 = arith.addf %34, %39 : vector<256x64xf32>
    %41 = vector.extract_strided_slice %28 {offsets = [0, 2], sizes = [256, 1], strides = [1, 1]} : vector<256x3xf32> to vector<256x1xf32>
    %42 = vector.extract_strided_slice %29 {offsets = [2, 0], sizes = [1, 64], strides = [1, 1]} : vector<3x64xf32> to vector<1x64xf32>
    %43 = vector.broadcast %41 : vector<256x1xf32> to vector<256x64xf32>
    %44 = vector.broadcast %42 : vector<1x64xf32> to vector<256x64xf32>
    %45 = arith.mulf %43, %44 : vector<256x64xf32>
    %46 = arith.addf %40, %45 : vector<256x64xf32>
    %c0_27 = arith.constant 0 : index
    %c0_28 = arith.constant 0 : index
    %47 = vector.load %arg14[%c0_27, %c0_28] : memref<256x64xf32, #tpu.memory_space<vmem>>, vector<256x64xf32>
    tpu.vector_store %arg14[%c0_27, %c0_28], %46 {strides = array<i32>} : memref<256x64xf32, #tpu.memory_space<vmem>>, vector<256x64xf32>,
    return
  }
  func.func @transform_0(%arg0: i32) -> (i32, i32) {
    %c0_i32 = arith.constant 0 : i32
    %c0_i32_0 = arith.constant 0 : i32
    return %arg0, %c0_i32 : i32, i32
  }
  func.func @transform_1(%arg0: i32) -> (i32, i32) {
    %c0_i32 = arith.constant 0 : i32
    %c0_i32_0 = arith.constant 0 : i32
    return %arg0, %c0_i32 : i32, i32
  }
  func.func @transform_2(%arg0: i32) -> (i32, i32) {
    %c0_i32 = arith.constant 0 : i32
    %c0_i32_0 = arith.constant 0 : i32
    %c0_i32_1 = arith.constant 0 : i32
    return %c0_i32, %c0_i32_0 : i32, i32
  }
  func.func @transform_3(%arg0: i32) -> (i32, i32) {
    %c0_i32 = arith.constant 0 : i32
    %c0_i32_0 = arith.constant 0 : i32
    %c0_i32_1 = arith.constant 0 : i32
    return %c0_i32, %c0_i32_0 : i32, i32
  }
  func.func @transform_4(%arg0: i32) -> (i32, i32) {
    %c0_i32 = arith.constant 0 : i32
    %c0_i32_0 = arith.constant 0 : i32
    %c0_i32_1 = arith.constant 0 : i32
    return %c0_i32, %c0_i32_0 : i32, i32
  }
  func.func @transform_5(%arg0: i32) -> (i32, i32) {
    %c0_i32 = arith.constant 0 : i32
    %c0_i32_0 = arith.constant 0 : i32
    %c0_i32_1 = arith.constant 0 : i32
    return %c0_i32, %c0_i32_0 : i32, i32
  }
  func.func @transform_6(%arg0: i32) -> (i32, i32) {
    %c0_i32 = arith.constant 0 : i32
    %c0_i32_0 = arith.constant 0 : i32
    %c0_i32_1 = arith.constant 0 : i32
    return %c0_i32, %c0_i32_0 : i32, i32
  }
  func.func @transform_7(%arg0: i32) -> (i32, i32) {
    %c0_i32 = arith.constant 0 : i32
    %c0_i32_0 = arith.constant 0 : i32
    %c0_i32_1 = arith.constant 0 : i32
    return %c0_i32, %c0_i32_0 : i32, i32
  }
  func.func @transform_8(%arg0: i32) -> (i32, i32) {
    %c0_i32 = arith.constant 0 : i32
    %c0_i32_0 = arith.constant 0 : i32
    %c0_i32_1 = arith.constant 0 : i32
    return %c0_i32, %c0_i32_0 : i32, i32
  }
  func.func @transform_9(%arg0: i32) -> (i32, i32) {
    %c0_i32 = arith.constant 0 : i32
    %c0_i32_0 = arith.constant 0 : i32
    %c0_i32_1 = arith.constant 0 : i32
    return %c0_i32, %c0_i32_0 : i32, i32
  }
  func.func @transform_10(%arg0: i32) -> (i32, i32) {
    %c0_i32 = arith.constant 0 : i32
    %c0_i32_0 = arith.constant 0 : i32
    return %arg0, %c0_i32 : i32, i32
  }
  func.func @transform_11(%arg0: i32) -> (i32, i32) {
    %c0_i32 = arith.constant 0 : i32
    %c0_i32_0 = arith.constant 0 : i32
    return %arg0, %c0_i32 : i32, i32
  }
  func.func @transform_12(%arg0: i32) -> (i32, i32) {
    %c0_i32 = arith.constant 0 : i32
    %c0_i32_0 = arith.constant 0 : i32
    return %arg0, %c0_i32 : i32, i32
  }
  func.func @transform_13(%arg0: i32) -> (i32, i32) {
    %c0_i32 = arith.constant 0 : i32
    %c0_i32_0 = arith.constant 0 : i32
    return %arg0, %c0_i32 : i32, i32
  }
}

</mosaic_0001>

<llo_original>
// kernel: tpu_custom_call.1
$region0: #{tpu_custom_call.1}
  #allocation0 [shape = 'u32[]', space=smem, size = 0x4, offset = 0x4, fixed_abs, tag = 'smem constant byte address 0x4 - core index']
  #allocation1 [shape = 'u32[144,128]{1,0:T(1,128)}', space=vmem, size = 0x12000, scoped, tag = 'internal scratch']
  %s0 = inlined_call_operand.vmem [shape: f32[256,64], index: 0, kind: input, shape index: {}]
  %s1 = inlined_call_operand.vmem [shape: f32[256,3], index: 1, kind: input, shape index: {}]
  %s2 = inlined_call_operand.vmem [shape: f32[64,64], index: 2, kind: input, shape index: {}]
  %s3 = inlined_call_operand.vmem [shape: f32[1,64], index: 3, kind: input, shape index: {}]
  %s4 = inlined_call_operand.vmem [shape: f32[1,64], index: 4, kind: input, shape index: {}]
  %s5 = inlined_call_operand.vmem [shape: f32[64,192], index: 5, kind: input, shape index: {}]
  %s6 = inlined_call_operand.vmem [shape: f32[1,192], index: 6, kind: input, shape index: {}]
  %s7 = inlined_call_operand.vmem [shape: f32[1,192], index: 7, kind: input, shape index: {}]
  %s8 = inlined_call_operand.vmem [shape: f32[1,192], index: 8, kind: input, shape index: {}]
  %s9 = inlined_call_operand.vmem [shape: f32[3,64], index: 9, kind: input, shape index: {}]
  %s10 = inlined_call_operand.vmem [shape: f32[256,64], index: 10, kind: output, shape index: {0}]
  %s11 = inlined_call_operand.vmem [shape: f32[256,64], index: 11, kind: output, shape index: {1}]
  %s12 = inlined_call_operand.vmem [shape: f32[256,64], index: 12, kind: output, shape index: {2}]
  %s13 = inlined_call_operand.vmem [shape: f32[256,64], index: 13, kind: output, shape index: {3}]
  %14 = xla_tuple %s10, %s11, %s12, %s13
  %s15 = sld [smem:[#allocation0]]
  $region74: #{tpu_custom_call.1} parent=0
    _
  %s17 = ssub.s32 1, %s15
  %s18 = scalar_select 0, %s17, %s15
  // Predicated region
  $region2: #{tpu_custom_call.1} parent=0 // pred_check
    _
  $region3: #{tpu_custom_call.1} parent=0 // pred_check_branch
    %20 = sbr.rel (0) target = $region5
  $region4: #{tpu_custom_call.1} parent=0 // pred_region
    _
  $region5: #{tpu_custom_call.1} parent=0 // pred_fallthru
    _
  // Predicated region
  $region6: #{tpu_custom_call.1} parent=0 // pred_check
    _
  $region7: #{tpu_custom_call.1} parent=0 // pred_check_branch
    %22 = sbr.rel (0) target = $region9
  $region8: #{tpu_custom_call.1} parent=0 // pred_region
    _
  $region9: #{tpu_custom_call.1} parent=0 // pred_fallthru
    _
  // Predicated region
  $region10: #{tpu_custom_call.1} parent=0 // pred_check
    _
  $region11: #{tpu_custom_call.1} parent=0 // pred_check_branch
    %24 = sbr.rel (0) target = $region13
  $region12: #{tpu_custom_call.1} parent=0 // pred_region
    _
  $region13: #{tpu_custom_call.1} parent=0 // pred_fallthru
    _
  // Predicated region
  $region14: #{tpu_custom_call.1} parent=0 // pred_check
    _
  $region15: #{tpu_custom_call.1} parent=0 // pred_check_branch
    %26 = sbr.rel (0) target = $region17
  $region16: #{tpu_custom_call.1} parent=0 // pred_region
    _
  $region17: #{tpu_custom_call.1} parent=0 // pred_fallthru
    _
  // Predicated region
  $region18: #{tpu_custom_call.1} parent=0 // pred_check
    _
  $region19: #{tpu_custom_call.1} parent=0 // pred_check_branch
    %28 = sbr.rel (0) target = $region21
  $region20: #{tpu_custom_call.1} parent=0 // pred_region
    _
  $region21: #{tpu_custom_call.1} parent=0 // pred_fallthru
    _
  // Predicated region
  $region22: #{tpu_custom_call.1} parent=0 // pred_check
    _
  $region23: #{tpu_custom_call.1} parent=0 // pred_check_branch
    %30 = sbr.rel (0) target = $region25
  $region24: #{tpu_custom_call.1} parent=0 // pred_region
    _
  $region25: #{tpu_custom_call.1} parent=0 // pred_fallthru
    _
  // Predicated region
  $region26: #{tpu_custom_call.1} parent=0 // pred_check
    _
  $region27: #{tpu_custom_call.1} parent=0 // pred_check_branch
    %32 = sbr.rel (0) target = $region29
  $region28: #{tpu_custom_call.1} parent=0 // pred_region
    _
  $region29: #{tpu_custom_call.1} parent=0 // pred_fallthru
    _
  // Predicated region
  $region30: #{tpu_custom_call.1} parent=0 // pred_check
    _
  $region31: #{tpu_custom_call.1} parent=0 // pred_check_branch
    %34 = sbr.rel (0) target = $region33
  $region32: #{tpu_custom_call.1} parent=0 // pred_region
    _
  $region33: #{tpu_custom_call.1} parent=0 // pred_fallthru
    _
  // Predicated region
  $region34: #{tpu_custom_call.1} parent=0 // pred_check
    _
  $region35: #{tpu_custom_call.1} parent=0 // pred_check_branch
    %36 = sbr.rel (0) target = $region37
  $region36: #{tpu_custom_call.1} parent=0 // pred_region
    _
  $region37: #{tpu_custom_call.1} parent=0 // pred_fallthru
    _
  // Predicated region
  $region38: #{tpu_custom_call.1} parent=0 // pred_check
    _
  $region39: #{tpu_custom_call.1} parent=0 // pred_check_branch
    %38 = sbr.rel (0) target = $region41
  $region40: #{tpu_custom_call.1} parent=0 // pred_region
    _
  $region41: #{tpu_custom_call.1} parent=0 // pred_fallthru
    _
  %v39 = vld [vmem:[%s0] sm:$0xff]
  %v40 = vld [vmem:[%s0 + $0x8] sm:$0xff]
  %v41 = vld [vmem:[%s0 + $0x10] sm:$0xff]
  %v42 = vld [vmem:[%s0 + $0x18] sm:$0xff]
  %v43 = vld [vmem:[%s0 + $0x20] sm:$0xff]
  %v44 = vld [vmem:[%s0 + $0x28] sm:$0xff]
  %v45 = vld [vmem:[%s0 + $0x30] sm:$0xff]
  %v46 = vld [vmem:[%s0 + $0x38] sm:$0xff]
  %v47 = vld [vmem:[%s0 + $0x40] sm:$0xff]
  %v48 = vld [vmem:[%s0 + $0x48] sm:$0xff]
  %v49 = vld [vmem:[%s0 + $0x50] sm:$0xff]
  %v50 = vld [vmem:[%s0 + $0x58] sm:$0xff]
  %v51 = vld [vmem:[%s0 + $0x60] sm:$0xff]
  %v52 = vld [vmem:[%s0 + $0x68] sm:$0xff]
  %v53 = vld [vmem:[%s0 + $0x70] sm:$0xff]
  %v54 = vld [vmem:[%s0 + $0x78] sm:$0xff]
  %v55 = vld [vmem:[%s0 + $0x80] sm:$0xff]
  %v56 = vld [vmem:[%s0 + $0x88] sm:$0xff]
  %v57 = vld [vmem:[%s0 + $0x90] sm:$0xff]
  %v58 = vld [vmem:[%s0 + $0x98] sm:$0xff]
  %v59 = vld [vmem:[%s0 + $0xa0] sm:$0xff]
  %v60 = vld [vmem:[%s0 + $0xa8] sm:$0xff]
  %v61 = vld [vmem:[%s0 + $0xb0] sm:$0xff]
  %v62 = vld [vmem:[%s0 + $0xb8] sm:$0xff]
  %v63 = vld [vmem:[%s0 + $0xc0] sm:$0xff]
  %v64 = vld [vmem:[%s0 + $0xc8] sm:$0xff]
  %v65 = vld [vmem:[%s0 + $0xd0] sm:$0xff]
  %v66 = vld [vmem:[%s0 + $0xd8] sm:$0xff]
  %v67 = vld [vmem:[%s0 + $0xe0] sm:$0xff]
  %v68 = vld [vmem:[%s0 + $0xe8] sm:$0xff]
  %v69 = vld [vmem:[%s0 + $0xf0] sm:$0xff]
  %v70 = vld [vmem:[%s0 + $0xf8] sm:$0xff]
  %v71 = vld [vmem:[%s2] sm:$0xff]
  %v72 = vld [vmem:[%s2 + $0x8] sm:$0xff]
  %v73 = vld [vmem:[%s2 + $0x10] sm:$0xff]
  %v74 = vld [vmem:[%s2 + $0x18] sm:$0xff]
  %v75 = vld [vmem:[%s2 + $0x20] sm:$0xff]
  %v76 = vld [vmem:[%s2 + $0x28] sm:$0xff]
  %v77 = vld [vmem:[%s2 + $0x30] sm:$0xff]
  %v78 = vld [vmem:[%s2 + $0x38] sm:$0xff]
  %vm79 = vcmask 523264
  %v81 = vsel %vm79, %v39, 0
  %v84 = vsel %vm79, %v40, 0
  %v87 = vsel %vm79, %v41, 0
  %v90 = vsel %vm79, %v42, 0
  %v93 = vsel %vm79, %v43, 0
  %v96 = vsel %vm79, %v44, 0
  %v99 = vsel %vm79, %v45, 0
  %v102 = vsel %vm79, %v46, 0
  %v105 = vsel %vm79, %v47, 0
  %v108 = vsel %vm79, %v48, 0
  %v111 = vsel %vm79, %v49, 0
  %v114 = vsel %vm79, %v50, 0
  %v117 = vsel %vm79, %v51, 0
  %v120 = vsel %vm79, %v52, 0
  %v123 = vsel %vm79, %v53, 0
  %v126 = vsel %vm79, %v54, 0
  %v129 = vsel %vm79, %v55, 0
  %v132 = vsel %vm79, %v56, 0
  %v135 = vsel %vm79, %v57, 0
  %v138 = vsel %vm79, %v58, 0
  %v141 = vsel %vm79, %v59, 0
  %v144 = vsel %vm79, %v60, 0
  %v147 = vsel %vm79, %v61, 0
  %v150 = vsel %vm79, %v62, 0
  %v153 = vsel %vm79, %v63, 0
  %v156 = vsel %vm79, %v64, 0
  %v159 = vsel %vm79, %v65, 0
  %v162 = vsel %vm79, %v66, 0
  %v165 = vsel %vm79, %v67, 0
  %v168 = vsel %vm79, %v68, 0
  %v171 = vsel %vm79, %v69, 0
  %v174 = vsel %vm79, %v70, 0
  %176 = vmatprep.subr.mxu0 0.0
  %177 = vmatpush1.msra.mxu0 %v71
  %178 = vmatprep.subr.mxu0 0.0
  %179 = vmatpush1.msra.mxu0 %v72
  %180 = vmatprep.subr.mxu0 0.0
  %181 = vmatpush1.msra.mxu0 %v73
  %182 = vmatprep.subr.mxu0 0.0
  %183 = vmatpush1.msra.mxu0 %v74
  %184 = vmatprep.subr.mxu0 0.0
  %185 = vmatpush1.msra.mxu0 %v75
  %186 = vmatprep.subr.mxu0 0.0
  %187 = vmatpush1.msra.mxu0 %v76
  %188 = vmatprep.subr.mxu0 0.0
  %189 = vmatpush1.msra.mxu0 %v77
  %190 = vmatprep.subr.mxu0 0.0
  %191 = vmatpush1.msra.mxu0 %v78
  %192 = vmatprep.subr.mxu0 0.0
  %193 = vmatpush1.msra.mxu0 0.0
  %194 = vmatprep.subr.mxu0 0.0
  %195 = vmatpush1.msra.mxu0 0.0
  %196 = vmatprep.subr.mxu0 0.0
  %197 = vmatpush1.msra.mxu0 0.0
  %198 = vmatprep.subr.mxu0 0.0
  %199 = vmatpush1.msra.mxu0 0.0
  %200 = vmatprep.subr.mxu0 0.0
  %201 = vmatpush1.msra.mxu0 0.0
  %202 = vmatprep.subr.mxu0 0.0
  %203 = vmatpush1.msra.mxu0 0.0
  %204 = vmatprep.subr.mxu0 0.0
  %205 = vmatpush1.msra.mxu0 0.0
  %206 = vmatprep.subr.mxu0 0.0
  %207 = vmatpush1.msra.mxu0 0.0
  %208 = vmatprep.subr.mxu0 0.0
  %209 = vmatpush1.msra.mxu0 0.0
  %210 = vmatprep.subr.mxu0 0.0
  %211 = vmatpush1.msra.mxu0 0.0
  %212 = vmatprep.subr.mxu0 0.0
  %213 = vmatpush1.msra.mxu0 0.0
  %214 = vmatprep.subr.mxu0 0.0
  %215 = vmatpush1.msra.mxu0 0.0
  %216 = vmatprep.subr.mxu0 0.0
  %217 = vmatpush1.msra.mxu0 0.0
  %218 = vmatprep.subr.mxu0 0.0
  %219 = vmatpush1.msra.mxu0 0.0
  %220 = vmatprep.subr.mxu0 0.0
  %221 = vmatpush1.msra.mxu0 0.0
  %222 = vmatprep.subr.mxu0 0.0
  %223 = vmatpush1.msra.mxu0 0.0
  %224 = vmatprep.subr.mxu0 0.0
  %225 = vmatpush1.msra.mxu0 0.0
  %226 = vmatprep.subr.mxu0 0.0
  %227 = vmatpush1.msra.mxu0 0.0
  %228 = vmatprep.subr.mxu0 0.0
  %229 = vmatpush1.msra.mxu0 0.0
  %230 = vmatprep.subr.mxu0 0.0
  %231 = vmatpush1.msra.mxu0 0.0
  %232 = vmatprep.subr.mxu0 0.0
  %233 = vmatpush1.msra.mxu0 0.0
  %234 = vmatprep.subr.mxu0 0.0
  %235 = vmatpush1.msra.mxu0 0.0
  %236 = vmatprep.subr.mxu0 0.0
  %237 = vmatpush1.msra.mxu0 0.0
  %238 = vmatprep.subr.mxu0 0.0
  %239 = vmatpush1.msra.mxu0 0.0
  %240 = vmatprep.mubr.f32.mxu0 0.0
  %241 = vmatmul.mubr.f32.gmra.mrb[0].mxu0 %v81
  %v242 = vpop.f32.mrb[0].mxu0
  %v243 = vadd.f32 0.0, %v242
  %v244 = vpop.f32.mrb[0].mxu0
  %245 = vmatprep.mubr.f32.mxu0 0.0
  %246 = vmatmul.mubr.f32.gmra.mrb[0].mxu0 %v84
  %v247 = vpop.f32.mrb[0].mxu0
  %v248 = vadd.f32 0.0, %v247
  %v249 = vpop.f32.mrb[0].mxu0
  %250 = vmatprep.mubr.f32.mxu0 0.0
  %251 = vmatmul.mubr.f32.gmra.mrb[0].mxu0 %v87
  %v252 = vpop.f32.mrb[0].mxu0
  %v253 = vadd.f32 0.0, %v252
  %v254 = vpop.f32.mrb[0].mxu0
  %255 = vmatprep.mubr.f32.mxu0 0.0
  %256 = vmatmul.mubr.f32.gmra.mrb[0].mxu0 %v90
  %v257 = vpop.f32.mrb[0].mxu0
  %v258 = vadd.f32 0.0, %v257
  %v259 = vpop.f32.mrb[0].mxu0
  %260 = vmatprep.mubr.f32.mxu0 0.0
  %261 = vmatmul.mubr.f32.gmra.mrb[0].mxu0 %v93
  %v262 = vpop.f32.mrb[0].mxu0
  %v263 = vadd.f32 0.0, %v262
  %v264 = vpop.f32.mrb[0].mxu0
  %265 = vmatprep.mubr.f32.mxu0 0.0
  %266 = vmatmul.mubr.f32.gmra.mrb[0].mxu0 %v96
  %v267 = vpop.f32.mrb[0].mxu0
  %v268 = vadd.f32 0.0, %v267
  %v269 = vpop.f32.mrb[0].mxu0
  %270 = vmatprep.mubr.f32.mxu0 0.0
  %271 = vmatmul.mubr.f32.gmra.mrb[0].mxu0 %v99
  %v272 = vpop.f32.mrb[0].mxu0
  %v273 = vadd.f32 0.0, %v272
  %v274 = vpop.f32.mrb[0].mxu0
  %275 = vmatprep.mubr.f32.mxu0 0.0
  %276 = vmatmul.mubr.f32.gmra.mrb[0].mxu0 %v102
  %v277 = vpop.f32.mrb[0].mxu0
  %v278 = vadd.f32 0.0, %v277
  %v279 = vpop.f32.mrb[0].mxu0
  %280 = vmatprep.mubr.f32.mxu0 0.0
  %281 = vmatmul.mubr.f32.gmra.mrb[0].mxu0 %v105
  %v282 = vpop.f32.mrb[0].mxu0
  %v283 = vadd.f32 0.0, %v282
  %v284 = vpop.f32.mrb[0].mxu0
  %285 = vmatprep.mubr.f32.mxu0 0.0
  %286 = vmatmul.mubr.f32.gmra.mrb[0].mxu0 %v108
  %v287 = vpop.f32.mrb[0].mxu0
  %v288 = vadd.f32 0.0, %v287
  %v289 = vpop.f32.mrb[0].mxu0
  %290 = vmatprep.mubr.f32.mxu0 0.0
  %291 = vmatmul.mubr.f32.gmra.mrb[0].mxu0 %v111
  %v292 = vpop.f32.mrb[0].mxu0
  %v293 = vadd.f32 0.0, %v292
  %v294 = vpop.f32.mrb[0].mxu0
  %295 = vmatprep.mubr.f32.mxu0 0.0
  %296 = vmatmul.mubr.f32.gmra.mrb[0].mxu0 %v114
  %v297 = vpop.f32.mrb[0].mxu0
  %v298 = vadd.f32 0.0, %v297
  %v299 = vpop.f32.mrb[0].mxu0
  %300 = vmatprep.mubr.f32.mxu0 0.0
  %301 = vmatmul.mubr.f32.gmra.mrb[0].mxu0 %v117
  %v302 = vpop.f32.mrb[0].mxu0
  %v303 = vadd.f32 0.0, %v302
  %v304 = vpop.f32.mrb[0].mxu0
  %305 = vmatprep.mubr.f32.mxu0 0.0
  %306 = vmatmul.mubr.f32.gmra.mrb[0].mxu0 %v120
  %v307 = vpop.f32.mrb[0].mxu0
  %v308 = vadd.f32 0.0, %v307
  %v309 = vpop.f32.mrb[0].mxu0
  %310 = vmatprep.mubr.f32.mxu0 0.0
  %311 = vmatmul.mubr.f32.gmra.mrb[0].mxu0 %v123
  %v312 = vpop.f32.mrb[0].mxu0
  %v313 = vadd.f32 0.0, %v312
  %v314 = vpop.f32.mrb[0].mxu0
  %315 = vmatprep.mubr.f32.mxu0 0.0
  %316 = vmatmul.mubr.f32.gmra.mrb[0].mxu0 %v126
  %v317 = vpop.f32.mrb[0].mxu0
  %v318 = vadd.f32 0.0, %v317
  %v319 = vpop.f32.mrb[0].mxu0
  %320 = vmatprep.mubr.f32.mxu0 0.0
  %321 = vmatmul.mubr.f32.gmra.mrb[0].mxu0 %v129
  %v322 = vpop.f32.mrb[0].mxu0
  %v323 = vadd.f32 0.0, %v322
  %v324 = vpop.f32.mrb[0].mxu0
  %325 = vmatprep.mubr.f32.mxu0 0.0
  %326 = vmatmul.mubr.f32.gmra.mrb[0].mxu0 %v132
  %v327 = vpop.f32.mrb[0].mxu0
  %v328 = vadd.f32 0.0, %v327
  %v329 = vpop.f32.mrb[0].mxu0
  %330 = vmatprep.mubr.f32.mxu0 0.0
  %331 = vmatmul.mubr.f32.gmra.mrb[0].mxu0 %v135
  %v332 = vpop.f32.mrb[0].mxu0
  %v333 = vadd.f32 0.0, %v332
  %v334 = vpop.f32.mrb[0].mxu0
  %335 = vmatprep.mubr.f32.mxu0 0.0
  %336 = vmatmul.mubr.f32.gmra.mrb[0].mxu0 %v138
  %v337 = vpop.f32.mrb[0].mxu0
  %v338 = vadd.f32 0.0, %v337
  %v339 = vpop.f32.mrb[0].mxu0
  %340 = vmatprep.mubr.f32.mxu0 0.0
  %341 = vmatmul.mubr.f32.gmra.mrb[0].mxu0 %v141
  %v342 = vpop.f32.mrb[0].mxu0
  %v343 = vadd.f32 0.0, %v342
  %v344 = vpop.f32.mrb[0].mxu0
  %345 = vmatprep.mubr.f32.mxu0 0.0
  %346 = vmatmul.mubr.f32.gmra.mrb[0].mxu0 %v144
  %v347 = vpop.f32.mrb[0].mxu0
  %v348 = vadd.f32 0.0, %v347
  %v349 = vpop.f32.mrb[0].mxu0
  %350 = vmatprep.mubr.f32.mxu0 0.0
  %351 = vmatmul.mubr.f32.gmra.mrb[0].mxu0 %v147
  %v352 = vpop.f32.mrb[0].mxu0
  %v353 = vadd.f32 0.0, %v352
  %v354 = vpop.f32.mrb[0].mxu0
  %355 = vmatprep.mubr.f32.mxu0 0.0
  %356 = vmatmul.mubr.f32.gmra.mrb[0].mxu0 %v150
  %v357 = vpop.f32.mrb[0].mxu0
  %v358 = vadd.f32 0.0, %v357
  %v359 = vpop.f32.mrb[0].mxu0
  %360 = vmatprep.mubr.f32.mxu0 0.0
  %361 = vmatmul.mubr.f32.gmra.mrb[0].mxu0 %v153
  %v362 = vpop.f32.mrb[0].mxu0
  %v363 = vadd.f32 0.0, %v362
  %v364 = vpop.f32.mrb[0].mxu0
  %365 = vmatprep.mubr.f32.mxu0 0.0
  %366 = vmatmul.mubr.f32.gmra.mrb[0].mxu0 %v156
  %v367 = vpop.f32.mrb[0].mxu0
  %v368 = vadd.f32 0.0, %v367
  %v369 = vpop.f32.mrb[0].mxu0
  %370 = vmatprep.mubr.f32.mxu0 0.0
  %371 = vmatmul.mubr.f32.gmra.mrb[0].mxu0 %v159
  %v372 = vpop.f32.mrb[0].mxu0
  %v373 = vadd.f32 0.0, %v372
  %v374 = vpop.f32.mrb[0].mxu0
  %375 = vmatprep.mubr.f32.mxu0 0.0
  %376 = vmatmul.mubr.f32.gmra.mrb[0].mxu0 %v162
  %v377 = vpop.f32.mrb[0].mxu0
  %v378 = vadd.f32 0.0, %v377
  %v379 = vpop.f32.mrb[0].mxu0
  %380 = vmatprep.mubr.f32.mxu0 0.0
  %381 = vmatmul.mubr.f32.gmra.mrb[0].mxu0 %v165
  %v382 = vpop.f32.mrb[0].mxu0
  %v383 = vadd.f32 0.0, %v382
  %v384 = vpop.f32.mrb[0].mxu0
  %385 = vmatprep.mubr.f32.mxu0 0.0
  %386 = vmatmul.mubr.f32.gmra.mrb[0].mxu0 %v168
  %v387 = vpop.f32.mrb[0].mxu0
  %v388 = vadd.f32 0.0, %v387
  %v389 = vpop.f32.mrb[0].mxu0
  %390 = vmatprep.mubr.f32.mxu0 0.0
  %391 = vmatmul.mubr.f32.gmra.mrb[0].mxu0 %v171
  %v392 = vpop.f32.mrb[0].mxu0
  %v393 = vadd.f32 0.0, %v392
  %v394 = vpop.f32.mrb[0].mxu0
  %395 = vmatprep.mubr.f32.mxu0 0.0
  %396 = vmatmul.mubr.f32.gmra.mrb[0].mxu0 %v174
  %v397 = vpop.f32.mrb[0].mxu0
  %v398 = vadd.f32 0.0, %v397
  %v399 = vpop.f32.mrb[0].mxu0
  %400 = vdwg.mxu0
  %v401 = vld [vmem:[%s3] sm:$0x1]
  %v403 = vlaneseq
  %v404 = vshrl.u32 %v403, 7
  %v405 = vsub.s32 0, %v404
  %v406 = vrot.slane %v401, %v405
  %v408 = vmul.f32 %v243, %v406
  %v409 = vmul.f32 %v248, %v406
  %v410 = vmul.f32 %v253, %v406
  %v411 = vmul.f32 %v258, %v406
  %v412 = vmul.f32 %v263, %v406
  %v413 = vmul.f32 %v268, %v406
  %v414 = vmul.f32 %v273, %v406
  %v415 = vmul.f32 %v278, %v406
  %v416 = vmul.f32 %v283, %v406
  %v417 = vmul.f32 %v288, %v406
  %v418 = vmul.f32 %v293, %v406
  %v419 = vmul.f32 %v298, %v406
  %v420 = vmul.f32 %v303, %v406
  %v421 = vmul.f32 %v308, %v406
  %v422 = vmul.f32 %v313, %v406
  %v423 = vmul.f32 %v318, %v406
  %v424 = vmul.f32 %v323, %v406
  %v425 = vmul.f32 %v328, %v406
  %v426 = vmul.f32 %v333, %v406
  %v427 = vmul.f32 %v338, %v406
  %v428 = vmul.f32 %v343, %v406
  %v429 = vmul.f32 %v348, %v406
  %v430 = vmul.f32 %v353, %v406
  %v431 = vmul.f32 %v358, %v406
  %v432 = vmul.f32 %v363, %v406
  %v433 = vmul.f32 %v368, %v406
  %v434 = vmul.f32 %v373, %v406
  %v435 = vmul.f32 %v378, %v406
  %v436 = vmul.f32 %v383, %v406
  %v437 = vmul.f32 %v388, %v406
  %v438 = vmul.f32 %v393, %v406
  %v439 = vmul.f32 %v398, %v406
  %v440 = vld [vmem:[%s4] sm:$0x1]
  %v442 = vlaneseq
  %v443 = vshrl.u32 %v442, 7
  %v444 = vsub.s32 0, %v443
  %v445 = vrot.slane %v440, %v444
  %v447 = vadd.f32 %v408, %v445
  %v448 = vadd.f32 %v409, %v445
  %v449 = vadd.f32 %v410, %v445
  %v450 = vadd.f32 %v411, %v445
  %v451 = vadd.f32 %v412, %v445
  %v452 = vadd.f32 %v413, %v445
  %v453 = vadd.f32 %v414, %v445
  %v454 = vadd.f32 %v415, %v445
  %v455 = vadd.f32 %v416, %v445
  %v456 = vadd.f32 %v417, %v445
  %v457 = vadd.f32 %v418, %v445
  %v458 = vadd.f32 %v419, %v445
  %v459 = vadd.f32 %v420, %v445
  %v460 = vadd.f32 %v421, %v445
  %v461 = vadd.f32 %v422, %v445
  %v462 = vadd.f32 %v423, %v445
  %v463 = vadd.f32 %v424, %v445
  %v464 = vadd.f32 %v425, %v445
  %v465 = vadd.f32 %v426, %v445
  %v466 = vadd.f32 %v427, %v445
  %v467 = vadd.f32 %v428, %v445
  %v468 = vadd.f32 %v429, %v445
  %v469 = vadd.f32 %v430, %v445
  %v470 = vadd.f32 %v431, %v445
  %v471 = vadd.f32 %v432, %v445
  %v472 = vadd.f32 %v433, %v445
  %v473 = vadd.f32 %v434, %v445
  %v474 = vadd.f32 %v435, %v445
  %v475 = vadd.f32 %v436, %v445
  %v476 = vadd.f32 %v437, %v445
  %v477 = vadd.f32 %v438, %v445
  %v478 = vadd.f32 %v439, %v445
  %v479 = vmax.f32 %v447, 0.0
  %v480 = vmax.f32 %v448, 0.0
  %v481 = vmax.f32 %v449, 0.0
  %v482 = vmax.f32 %v450, 0.0
  %v483 = vmax.f32 %v451, 0.0
  %v484 = vmax.f32 %v452, 0.0
  %v485 = vmax.f32 %v453, 0.0
  %v486 = vmax.f32 %v454, 0.0
  %v487 = vmax.f32 %v455, 0.0
  %v488 = vmax.f32 %v456, 0.0
  %v489 = vmax.f32 %v457, 0.0
  %v490 = vmax.f32 %v458, 0.0
  %v491 = vmax.f32 %v459, 0.0
  %v492 = vmax.f32 %v460, 0.0
  %v493 = vmax.f32 %v461, 0.0
  %v494 = vmax.f32 %v462, 0.0
  %v495 = vmax.f32 %v463, 0.0
  %v496 = vmax.f32 %v464, 0.0
  %v497 = vmax.f32 %v465, 0.0
  %v498 = vmax.f32 %v466, 0.0
  %v499 = vmax.f32 %v467, 0.0
  %v500 = vmax.f32 %v468, 0.0
  %v501 = vmax.f32 %v469, 0.0
  %v502 = vmax.f32 %v470, 0.0
  %v503 = vmax.f32 %v471, 0.0
  %v504 = vmax.f32 %v472, 0.0
  %v505 = vmax.f32 %v473, 0.0
  %v506 = vmax.f32 %v474, 0.0
  %v507 = vmax.f32 %v475, 0.0
  %v508 = vmax.f32 %v476, 0.0
  %v509 = vmax.f32 %v477, 0.0
  %v510 = vmax.f32 %v478, 0.0
  %v511 = vld [vmem:[%s5] sm:$0xff]
  %v512 = vld [vmem:[%s5 + $0x8] sm:$0xff]
  %v513 = vld [vmem:[%s5 + $0x10] sm:$0xff]
  %v514 = vld [vmem:[%s5 + $0x18] sm:$0xff]
  %v515 = vld [vmem:[%s5 + $0x20] sm:$0xff]
  %v516 = vld [vmem:[%s5 + $0x28] sm:$0xff]
  %v517 = vld [vmem:[%s5 + $0x30] sm:$0xff]
  %v518 = vld [vmem:[%s5 + $0x38] sm:$0xff]
  %v519 = vld [vmem:[%s5 + $0x40] sm:$0xff]
  %v520 = vld [vmem:[%s5 + $0x48] sm:$0xff]
  %v521 = vld [vmem:[%s5 + $0x50] sm:$0xff]
  %v522 = vld [vmem:[%s5 + $0x58] sm:$0xff]
  %v523 = vld [vmem:[%s5 + $0x60] sm:$0xff]
  %v524 = vld [vmem:[%s5 + $0x68] sm:$0xff]
  %v525 = vld [vmem:[%s5 + $0x70] sm:$0xff]
  %v526 = vld [vmem:[%s5 + $0x78] sm:$0xff]
  %v528 = vsel %vm79, %v479, 0
  %v531 = vsel %vm79, %v480, 0
  %v534 = vsel %vm79, %v481, 0
  %v537 = vsel %vm79, %v482, 0
  %v540 = vsel %vm79, %v483, 0
  %v543 = vsel %vm79, %v484, 0
  %v546 = vsel %vm79, %v485, 0
  %v549 = vsel %vm79, %v486, 0
  %v552 = vsel %vm79, %v487, 0
  %v555 = vsel %vm79, %v488, 0
  %v558 = vsel %vm79, %v489, 0
  %v561 = vsel %vm79, %v490, 0
  %v564 = vsel %vm79, %v491, 0
  %v567 = vsel %vm79, %v492, 0
  %v570 = vsel %vm79, %v493, 0
  %v573 = vsel %vm79, %v494, 0
  %v576 = vsel %vm79, %v495, 0
  %v579 = vsel %vm79, %v496, 0
  %v582 = vsel %vm79, %v497, 0
  %v585 = vsel %vm79, %v498, 0
  %v588 = vsel %vm79, %v499, 0
  %v591 = vsel %vm79, %v500, 0
  %v594 = vsel %vm79, %v501, 0
  %v597 = vsel %vm79, %v502, 0
  %v600 = vsel %vm79, %v503, 0
  %v603 = vsel %vm79, %v504, 0
  %v606 = vsel %vm79, %v505, 0
  %v609 = vsel %vm79, %v506, 0
  %v612 = vsel %vm79, %v507, 0
  %v615 = vsel %vm79, %v508, 0
  %v618 = vsel %vm79, %v509, 0
  %v621 = vsel %vm79, %v510, 0
  %623 = vmatprep.subr.mxu0 %v512
  %624 = vmatpush1.msra.mxu0 %v511
  %625 = vmatprep.subr.mxu0 %v514
  %626 = vmatpush1.msra.mxu0 %v513
  %627 = vmatprep.subr.mxu0 %v516
  %628 = vmatpush1.msra.mxu0 %v515
  %629 = vmatprep.subr.mxu0 %v518
  %630 = vmatpush1.msra.mxu0 %v517
  %631 = vmatprep.subr.mxu0 %v520
  %632 = vmatpush1.msra.mxu0 %v519
  %633 = vmatprep.subr.mxu0 %v522
  %634 = vmatpush1.msra.mxu0 %v521
  %635 = vmatprep.subr.mxu0 %v524
  %636 = vmatpush1.msra.mxu0 %v523
  %637 = vmatprep.subr.mxu0 %v526
  %638 = vmatpush1.msra.mxu0 %v525
  %639 = vmatprep.subr.mxu0 0.0
  %640 = vmatpush1.msra.mxu0 0.0
  %641 = vmatprep.subr.mxu0 0.0
  %642 = vmatpush1.msra.mxu0 0.0
  %643 = vmatprep.subr.mxu0 0.0
  %644 = vmatpush1.msra.mxu0 0.0
  %645 = vmatprep.subr.mxu0 0.0
  %646 = vmatpush1.msra.mxu0 0.0
  %647 = vmatprep.subr.mxu0 0.0
  %648 = vmatpush1.msra.mxu0 0.0
  %649 = vmatprep.subr.mxu0 0.0
  %650 = vmatpush1.msra.mxu0 0.0
  %651 = vmatprep.subr.mxu0 0.0
  %652 = vmatpush1.msra.mxu0 0.0
  %653 = vmatprep.subr.mxu0 0.0
  %654 = vmatpush1.msra.mxu0 0.0
  %655 = vmatprep.subr.mxu0 0.0
  %656 = vmatpush1.msra.mxu0 0.0
  %657 = vmatprep.subr.mxu0 0.0
  %658 = vmatpush1.msra.mxu0 0.0
  %659 = vmatprep.subr.mxu0 0.0
  %660 = vmatpush1.msra.mxu0 0.0
  %661 = vmatprep.subr.mxu0 0.0
  %662 = vmatpush1.msra.mxu0 0.0
  %663 = vmatprep.subr.mxu0 0.0
  %664 = vmatpush1.msra.mxu0 0.0
  %665 = vmatprep.subr.mxu0 0.0
  %666 = vmatpush1.msra.mxu0 0.0
  %667 = vmatprep.subr.mxu0 0.0
  %668 = vmatpush1.msra.mxu0 0.0
  %669 = vmatprep.subr.mxu0 0.0
  %670 = vmatpush1.msra.mxu0 0.0
  %671 = vmatprep.subr.mxu0 0.0
  %672 = vmatpush1.msra.mxu0 0.0
  %673 = vmatprep.subr.mxu0 0.0
  %674 = vmatpush1.msra.mxu0 0.0
  %675 = vmatprep.subr.mxu0 0.0
  %676 = vmatpush1.msra.mxu0 0.0
  %677 = vmatprep.subr.mxu0 0.0
  %678 = vmatpush1.msra.mxu0 0.0
  %679 = vmatprep.subr.mxu0 0.0
  %680 = vmatpush1.msra.mxu0 0.0
  %681 = vmatprep.subr.mxu0 0.0
  %682 = vmatpush1.msra.mxu0 0.0
  %683 = vmatprep.subr.mxu0 0.0
  %684 = vmatpush1.msra.mxu0 0.0
  %685 = vmatprep.subr.mxu0 0.0
  %686 = vmatpush1.msra.mxu0 0.0
  %687 = vmatprep.mubr.f32.mxu0 0.0
  %688 = vmatmul.mubr.f32.gmra.mrb[0].mxu0 %v528
  %v689 = vpop.f32.mrb[0].mxu0
  %v690 = vadd.f32 0.0, %v689
  %v691 = vpop.f32.mrb[0].mxu0
  %v692 = vadd.f32 0.0, %v691
  %693 = vmatprep.mubr.f32.mxu0 0.0
  %694 = vmatmul.mubr.f32.gmra.mrb[0].mxu0 %v531
  %v695 = vpop.f32.mrb[0].mxu0
  %v696 = vadd.f32 0.0, %v695
  %v697 = vpop.f32.mrb[0].mxu0
  %v698 = vadd.f32 0.0, %v697
  %699 = vmatprep.mubr.f32.mxu0 0.0
  %700 = vmatmul.mubr.f32.gmra.mrb[0].mxu0 %v534
  %v701 = vpop.f32.mrb[0].mxu0
  %v702 = vadd.f32 0.0, %v701
  %v703 = vpop.f32.mrb[0].mxu0
  %v704 = vadd.f32 0.0, %v703
  %705 = vmatprep.mubr.f32.mxu0 0.0
  %706 = vmatmul.mubr.f32.gmra.mrb[0].mxu0 %v537
  %v707 = vpop.f32.mrb[0].mxu0
  %v708 = vadd.f32 0.0, %v707
  %v709 = vpop.f32.mrb[0].mxu0
  %v710 = vadd.f32 0.0, %v709
  %711 = vmatprep.mubr.f32.mxu0 0.0
  %712 = vmatmul.mubr.f32.gmra.mrb[0].mxu0 %v540
  %v713 = vpop.f32.mrb[0].mxu0
  %v714 = vadd.f32 0.0, %v713
  %v715 = vpop.f32.mrb[0].mxu0
  %v716 = vadd.f32 0.0, %v715
  %717 = vmatprep.mubr.f32.mxu0 0.0
  %718 = vmatmul.mubr.f32.gmra.mrb[0].mxu0 %v543
  %v719 = vpop.f32.mrb[0].mxu0
  %v720 = vadd.f32 0.0, %v719
  %v721 = vpop.f32.mrb[0].mxu0
  %v722 = vadd.f32 0.0, %v721
  %723 = vmatprep.mubr.f32.mxu0 0.0
  %724 = vmatmul.mubr.f32.gmra.mrb[0].mxu0 %v546
  %v725 = vpop.f32.mrb[0].mxu0
  %v726 = vadd.f32 0.0, %v725
  %v727 = vpop.f32.mrb[0].mxu0
  %v728 = vadd.f32 0.0, %v727
  %729 = vmatprep.mubr.f32.mxu0 0.0
  %730 = vmatmul.mubr.f32.gmra.mrb[0].mxu0 %v549
  %v731 = vpop.f32.mrb[0].mxu0
  %v732 = vadd.f32 0.0, %v731
  %v733 = vpop.f32.mrb[0].mxu0
  %v734 = vadd.f32 0.0, %v733
  %735 = vmatprep.mubr.f32.mxu0 0.0
  %736 = vmatmul.mubr.f32.gmra.mrb[0].mxu0 %v552
  %v737 = vpop.f32.mrb[0].mxu0
  %v738 = vadd.f32 0.0, %v737
  %v739 = vpop.f32.mrb[0].mxu0
  %v740 = vadd.f32 0.0, %v739
  %741 = vmatprep.mubr.f32.mxu0 0.0
  %742 = vmatmul.mubr.f32.gmra.mrb[0].mxu0 %v555
  %v743 = vpop.f32.mrb[0].mxu0
  %v744 = vadd.f32 0.0, %v743
  %v745 = vpop.f32.mrb[0].mxu0
  %v746 = vadd.f32 0.0, %v745
  %747 = vmatprep.mubr.f32.mxu0 0.0
  %748 = vmatmul.mubr.f32.gmra.mrb[0].mxu0 %v558
  %v749 = vpop.f32.mrb[0].mxu0
  %v750 = vadd.f32 0.0, %v749
  %v751 = vpop.f32.mrb[0].mxu0
  %v752 = vadd.f32 0.0, %v751
  %753 = vmatprep.mubr.f32.mxu0 0.0
  %754 = vmatmul.mubr.f32.gmra.mrb[0].mxu0 %v561
  %v755 = vpop.f32.mrb[0].mxu0
  %v756 = vadd.f32 0.0, %v755
  %v757 = vpop.f32.mrb[0].mxu0
  %v758 = vadd.f32 0.0, %v757
  %759 = vmatprep.mubr.f32.mxu0 0.0
  %760 = vmatmul.mubr.f32.gmra.mrb[0].mxu0 %v564
  %v761 = vpop.f32.mrb[0].mxu0
  %v762 = vadd.f32 0.0, %v761
  %v763 = vpop.f32.mrb[0].mxu0
  %v764 = vadd.f32 0.0, %v763
  %765 = vmatprep.mubr.f32.mxu0 0.0
  %766 = vmatmul.mubr.f32.gmra.mrb[0].mxu0 %v567
  %v767 = vpop.f32.mrb[0].mxu0
  %v768 = vadd.f32 0.0, %v767
  %v769 = vpop.f32.mrb[0].mxu0
  %v770 = vadd.f32 0.0, %v769
  %771 = vmatprep.mubr.f32.mxu0 0.0
  %772 = vmatmul.mubr.f32.gmra.mrb[0].mxu0 %v570
  %v773 = vpop.f32.mrb[0].mxu0
  %v774 = vadd.f32 0.0, %v773
  %v775 = vpop.f32.mrb[0].mxu0
  %v776 = vadd.f32 0.0, %v775
  %777 = vmatprep.mubr.f32.mxu0 0.0
  %778 = vmatmul.mubr.f32.gmra.mrb[0].mxu0 %v573
  %v779 = vpop.f32.mrb[0].mxu0
  %v780 = vadd.f32 0.0, %v779
  %v781 = vpop.f32.mrb[0].mxu0
  %v782 = vadd.f32 0.0, %v781
  %783 = vmatprep.mubr.f32.mxu0 0.0
  %784 = vmatmul.mubr.f32.gmra.mrb[0].mxu0 %v576
  %v785 = vpop.f32.mrb[0].mxu0
  %v786 = vadd.f32 0.0, %v785
  %v787 = vpop.f32.mrb[0].mxu0
  %v788 = vadd.f32 0.0, %v787
  %789 = vmatprep.mubr.f32.mxu0 0.0
  %790 = vmatmul.mubr.f32.gmra.mrb[0].mxu0 %v579
  %v791 = vpop.f32.mrb[0].mxu0
  %v792 = vadd.f32 0.0, %v791
  %v793 = vpop.f32.mrb[0].mxu0
  %v794 = vadd.f32 0.0, %v793
  %795 = vmatprep.mubr.f32.mxu0 0.0
  %796 = vmatmul.mubr.f32.gmra.mrb[0].mxu0 %v582
  %v797 = vpop.f32.mrb[0].mxu0
  %v798 = vadd.f32 0.0, %v797
  %v799 = vpop.f32.mrb[0].mxu0
  %v800 = vadd.f32 0.0, %v799
  %801 = vmatprep.mubr.f32.mxu0 0.0
  %802 = vmatmul.mubr.f32.gmra.mrb[0].mxu0 %v585
  %v803 = vpop.f32.mrb[0].mxu0
  %v804 = vadd.f32 0.0, %v803
  %v805 = vpop.f32.mrb[0].mxu0
  %v806 = vadd.f32 0.0, %v805
  %807 = vmatprep.mubr.f32.mxu0 0.0
  %808 = vmatmul.mubr.f32.gmra.mrb[0].mxu0 %v588
  %v809 = vpop.f32.mrb[0].mxu0
  %v810 = vadd.f32 0.0, %v809
  %v811 = vpop.f32.mrb[0].mxu0
  %v812 = vadd.f32 0.0, %v811
  %813 = vmatprep.mubr.f32.mxu0 0.0
  %814 = vmatmul.mubr.f32.gmra.mrb[0].mxu0 %v591
  %v815 = vpop.f32.mrb[0].mxu0
  %v816 = vadd.f32 0.0, %v815
  %v817 = vpop.f32.mrb[0].mxu0
  %v818 = vadd.f32 0.0, %v817
  %819 = vmatprep.mubr.f32.mxu0 0.0
  %820 = vmatmul.mubr.f32.gmra.mrb[0].mxu0 %v594
  %v821 = vpop.f32.mrb[0].mxu0
  %v822 = vadd.f32 0.0, %v821
  %v823 = vpop.f32.mrb[0].mxu0
  %v824 = vadd.f32 0.0, %v823
  %825 = vmatprep.mubr.f32.mxu0 0.0
  %826 = vmatmul.mubr.f32.gmra.mrb[0].mxu0 %v597
  %v827 = vpop.f32.mrb[0].mxu0
  %v828 = vadd.f32 0.0, %v827
  %v829 = vpop.f32.mrb[0].mxu0
  %v830 = vadd.f32 0.0, %v829
  %831 = vmatprep.mubr.f32.mxu0 0.0
  %832 = vmatmul.mubr.f32.gmra.mrb[0].mxu0 %v600
  %v833 = vpop.f32.mrb[0].mxu0
  %v834 = vadd.f32 0.0, %v833
  %v835 = vpop.f32.mrb[0].mxu0
  %v836 = vadd.f32 0.0, %v835
  %837 = vmatprep.mubr.f32.mxu0 0.0
  %838 = vmatmul.mubr.f32.gmra.mrb[0].mxu0 %v603
  %v839 = vpop.f32.mrb[0].mxu0
  %v840 = vadd.f32 0.0, %v839
  %v841 = vpop.f32.mrb[0].mxu0
  %v842 = vadd.f32 0.0, %v841
  %843 = vmatprep.mubr.f32.mxu0 0.0
  %844 = vmatmul.mubr.f32.gmra.mrb[0].mxu0 %v606
  %v845 = vpop.f32.mrb[0].mxu0
  %v846 = vadd.f32 0.0, %v845
  %v847 = vpop.f32.mrb[0].mxu0
  %v848 = vadd.f32 0.0, %v847
  %849 = vmatprep.mubr.f32.mxu0 0.0
  %850 = vmatmul.mubr.f32.gmra.mrb[0].mxu0 %v609
  %v851 = vpop.f32.mrb[0].mxu0
  %v852 = vadd.f32 0.0, %v851
  %v853 = vpop.f32.mrb[0].mxu0
  %v854 = vadd.f32 0.0, %v853
  %855 = vmatprep.mubr.f32.mxu0 0.0
  %856 = vmatmul.mubr.f32.gmra.mrb[0].mxu0 %v612
  %v857 = vpop.f32.mrb[0].mxu0
  %v858 = vadd.f32 0.0, %v857
  %v859 = vpop.f32.mrb[0].mxu0
  %v860 = vadd.f32 0.0, %v859
  %861 = vmatprep.mubr.f32.mxu0 0.0
  %862 = vmatmul.mubr.f32.gmra.mrb[0].mxu0 %v615
  %v863 = vpop.f32.mrb[0].mxu0
  %v864 = vadd.f32 0.0, %v863
  %v865 = vpop.f32.mrb[0].mxu0
  %v866 = vadd.f32 0.0, %v865
  %867 = vmatprep.mubr.f32.mxu0 0.0
  %868 = vmatmul.mubr.f32.gmra.mrb[0].mxu0 %v618
  %v869 = vpop.f32.mrb[0].mxu0
  %v870 = vadd.f32 0.0, %v869
  %v871 = vpop.f32.mrb[0].mxu0
  %v872 = vadd.f32 0.0, %v871
  %873 = vmatprep.mubr.f32.mxu0 0.0
  %874 = vmatmul.mubr.f32.gmra.mrb[0].mxu0 %v621
  %v875 = vpop.f32.mrb[0].mxu0
  %v876 = vadd.f32 0.0, %v875
  %v877 = vpop.f32.mrb[0].mxu0
  %v878 = vadd.f32 0.0, %v877
  %879 = vdwg.mxu0
  %v880 = vld [vmem:[%s6] sm:$0x3]
  %v882 = vlaneseq
  %v883 = vshrl.u32 %v882, 7
  %v884 = vsub.s32 0, %v883
  %v885 = vrot.slane %v880, %v884
  %v886 = vlaneseq
  %v887 = vshrl.u32 %v886, 7
  %v888 = vsub.s32 1, %v887
  %v889 = vrot.slane %v880, %v888
  %v892 = vmul.f32 %v690, %v885
  %v893 = vmul.f32 %v692, %v889
  %v894 = vmul.f32 %v696, %v885
  %v895 = vmul.f32 %v698, %v889
  %v896 = vmul.f32 %v702, %v885
  %v897 = vmul.f32 %v704, %v889
  %v898 = vmul.f32 %v708, %v885
  %v899 = vmul.f32 %v710, %v889
  %v900 = vmul.f32 %v714, %v885
  %v901 = vmul.f32 %v716, %v889
  %v902 = vmul.f32 %v720, %v885
  %v903 = vmul.f32 %v722, %v889
  %v904 = vmul.f32 %v726, %v885
  %v905 = vmul.f32 %v728, %v889
  %v906 = vmul.f32 %v732, %v885
  %v907 = vmul.f32 %v734, %v889
  %v908 = vmul.f32 %v738, %v885
  %v909 = vmul.f32 %v740, %v889
  %v910 = vmul.f32 %v744, %v885
  %v911 = vmul.f32 %v746, %v889
  %v912 = vmul.f32 %v750, %v885
  %v913 = vmul.f32 %v752, %v889
  %v914 = vmul.f32 %v756, %v885
  %v915 = vmul.f32 %v758, %v889
  %v916 = vmul.f32 %v762, %v885
  %v917 = vmul.f32 %v764, %v889
  %v918 = vmul.f32 %v768, %v885
  %v919 = vmul.f32 %v770, %v889
  %v920 = vmul.f32 %v774, %v885
  %v921 = vmul.f32 %v776, %v889
  %v922 = vmul.f32 %v780, %v885
  %v923 = vmul.f32 %v782, %v889
  %v924 = vmul.f32 %v786, %v885
  %v925 = vmul.f32 %v788, %v889
  %v926 = vmul.f32 %v792, %v885
  %v927 = vmul.f32 %v794, %v889
  %v928 = vmul.f32 %v798, %v885
  %v929 = vmul.f32 %v800, %v889
  %v930 = vmul.f32 %v804, %v885
  %v931 = vmul.f32 %v806, %v889
  %v932 = vmul.f32 %v810, %v885
  %v933 = vmul.f32 %v812, %v889
  %v934 = vmul.f32 %v816, %v885
  %v935 = vmul.f32 %v818, %v889
  %v936 = vmul.f32 %v822, %v885
  %v937 = vmul.f32 %v824, %v889
  %v938 = vmul.f32 %v828, %v885
  %v939 = vmul.f32 %v830, %v889
  %v940 = vmul.f32 %v834, %v885
  %v941 = vmul.f32 %v836, %v889
  %v942 = vmul.f32 %v840, %v885
  %v943 = vmul.f32 %v842, %v889
  %v944 = vmul.f32 %v846, %v885
  %v945 = vmul.f32 %v848, %v889
  %v946 = vmul.f32 %v852, %v885
  %v947 = vmul.f32 %v854, %v889
  %v948 = vmul.f32 %v858, %v885
  %v949 = vmul.f32 %v860, %v889
  %v950 = vmul.f32 %v864, %v885
  %v951 = vmul.f32 %v866, %v889
  %v952 = vmul.f32 %v870, %v885
  %v953 = vmul.f32 %v872, %v889
  %v954 = vmul.f32 %v876, %v885
  %v955 = vmul.f32 %v878, %v889
  %v956 = vld [vmem:[%s7] sm:$0x3]
  %v958 = vlaneseq
  %v959 = vshrl.u32 %v958, 7
  %v960 = vsub.s32 0, %v959
  %v961 = vrot.slane %v956, %v960
  %v962 = vlaneseq
  %v963 = vshrl.u32 %v962, 7
  %v964 = vsub.s32 1, %v963
  %v965 = vrot.slane %v956, %v964
  %v968 = vadd.f32 %v892, %v961
  %v969 = vadd.f32 %v893, %v965
  %v970 = vadd.f32 %v894, %v961
  %v971 = vadd.f32 %v895, %v965
  %v972 = vadd.f32 %v896, %v961
  %v973 = vadd.f32 %v897, %v965
  %v974 = vadd.f32 %v898, %v961
  %v975 = vadd.f32 %v899, %v965
  %v976 = vadd.f32 %v900, %v961
  %v977 = vadd.f32 %v901, %v965
  %v978 = vadd.f32 %v902, %v961
  %v979 = vadd.f32 %v903, %v965
  %v980 = vadd.f32 %v904, %v961
  %v981 = vadd.f32 %v905, %v965
  %v982 = vadd.f32 %v906, %v961
  %v983 = vadd.f32 %v907, %v965
  %v984 = vadd.f32 %v908, %v961
  %v985 = vadd.f32 %v909, %v965
  %v986 = vadd.f32 %v910, %v961
  %v987 = vadd.f32 %v911, %v965
  %v988 = vadd.f32 %v912, %v961
  %v989 = vadd.f32 %v913, %v965
  %v990 = vadd.f32 %v914, %v961
  %v991 = vadd.f32 %v915, %v965
  %v992 = vadd.f32 %v916, %v961
  %v993 = vadd.f32 %v917, %v965
  %v994 = vadd.f32 %v918, %v961
  %v995 = vadd.f32 %v919, %v965
  %v996 = vadd.f32 %v920, %v961
  %v997 = vadd.f32 %v921, %v965
  %v998 = vadd.f32 %v922, %v961
  %v999 = vadd.f32 %v923, %v965
  %v1000 = vadd.f32 %v924, %v961
  %v1001 = vadd.f32 %v925, %v965
  %v1002 = vadd.f32 %v926, %v961
  %v1003 = vadd.f32 %v927, %v965
  %v1004 = vadd.f32 %v928, %v961
  %v1005 = vadd.f32 %v929, %v965
  %v1006 = vadd.f32 %v930, %v961
  %v1007 = vadd.f32 %v931, %v965
  %v1008 = vadd.f32 %v932, %v961
  %v1009 = vadd.f32 %v933, %v965
  %v1010 = vadd.f32 %v934, %v961
  %v1011 = vadd.f32 %v935, %v965
  %v1012 = vadd.f32 %v936, %v961
  %v1013 = vadd.f32 %v937, %v965
  %v1014 = vadd.f32 %v938, %v961
  %v1015 = vadd.f32 %v939, %v965
  %v1016 = vadd.f32 %v940, %v961
  %v1017 = vadd.f32 %v941, %v965
  %v1018 = vadd.f32 %v942, %v961
  %v1019 = vadd.f32 %v943, %v965
  %v1020 = vadd.f32 %v944, %v961
  %v1021 = vadd.f32 %v945, %v965
  %v1022 = vadd.f32 %v946, %v961
  %v1023 = vadd.f32 %v947, %v965
  %v1024 = vadd.f32 %v948, %v961
  %v1025 = vadd.f32 %v949, %v965
  %v1026 = vadd.f32 %v950, %v961
  %v1027 = vadd.f32 %v951, %v965
  %v1028 = vadd.f32 %v952, %v961
  %v1029 = vadd.f32 %v953, %v965
  %v1030 = vadd.f32 %v954, %v961
  %v1031 = vadd.f32 %v955, %v965
  %v1032 = vld [vmem:[%s8] sm:$0x3]
  %v1034 = vlaneseq
  %v1035 = vshrl.u32 %v1034, 7
  %v1036 = vsub.s32 0, %v1035
  %v1037 = vrot.slane %v1032, %v1036
  %v1038 = vlaneseq
  %v1039 = vshrl.u32 %v1038, 7
  %v1040 = vsub.s32 1, %v1039
  %v1041 = vrot.slane %v1032, %v1040
  %v1044 = vmax.f32 %v968, %v1037
  %v1045 = vmax.f32 %v969, %v1041
  %v1046 = vmax.f32 %v970, %v1037
  %v1047 = vmax.f32 %v971, %v1041
  %v1048 = vmax.f32 %v972, %v1037
  %v1049 = vmax.f32 %v973, %v1041
  %v1050 = vmax.f32 %v974, %v1037
  %v1051 = vmax.f32 %v975, %v1041
  %v1052 = vmax.f32 %v976, %v1037
  %v1053 = vmax.f32 %v977, %v1041
  %v1054 = vmax.f32 %v978, %v1037
  %v1055 = vmax.f32 %v979, %v1041
  %v1056 = vmax.f32 %v980, %v1037
  %v1057 = vmax.f32 %v981, %v1041
  %v1058 = vmax.f32 %v982, %v1037
  %v1059 = vmax.f32 %v983, %v1041
  %v1060 = vmax.f32 %v984, %v1037
  %v1061 = vmax.f32 %v985, %v1041
  %v1062 = vmax.f32 %v986, %v1037
  %v1063 = vmax.f32 %v987, %v1041
  %v1064 = vmax.f32 %v988, %v1037
  %v1065 = vmax.f32 %v989, %v1041
  %v1066 = vmax.f32 %v990, %v1037
  %v1067 = vmax.f32 %v991, %v1041
  %v1068 = vmax.f32 %v992, %v1037
  %v1069 = vmax.f32 %v993, %v1041
  %v1070 = vmax.f32 %v994, %v1037
  %v1071 = vmax.f32 %v995, %v1041
  %v1072 = vmax.f32 %v996, %v1037
  %v1073 = vmax.f32 %v997, %v1041
  %v1074 = vmax.f32 %v998, %v1037
  %v1075 = vmax.f32 %v999, %v1041
  %v1076 = vmax.f32 %v1000, %v1037
  %v1077 = vmax.f32 %v1001, %v1041
  %v1078 = vmax.f32 %v1002, %v1037
  %v1079 = vmax.f32 %v1003, %v1041
  %v1080 = vmax.f32 %v1004, %v1037
  %v1081 = vmax.f32 %v1005, %v1041
  %v1082 = vmax.f32 %v1006, %v1037
  %v1083 = vmax.f32 %v1007, %v1041
  %v1084 = vmax.f32 %v1008, %v1037
  %v1085 = vmax.f32 %v1009, %v1041
  %v1086 = vmax.f32 %v1010, %v1037
  %v1087 = vmax.f32 %v1011, %v1041
  %v1088 = vmax.f32 %v1012, %v1037
  %v1089 = vmax.f32 %v1013, %v1041
  %v1090 = vmax.f32 %v1014, %v1037
  %v1091 = vmax.f32 %v1015, %v1041
  %v1092 = vmax.f32 %v1016, %v1037
  %v1093 = vmax.f32 %v1017, %v1041
  %v1094 = vmax.f32 %v1018, %v1037
  %v1095 = vmax.f32 %v1019, %v1041
  %v1096 = vmax.f32 %v1020, %v1037
  %v1097 = vmax.f32 %v1021, %v1041
  %v1098 = vmax.f32 %v1022, %v1037
  %v1099 = vmax.f32 %v1023, %v1041
  %v1100 = vmax.f32 %v1024, %v1037
  %v1101 = vmax.f32 %v1025, %v1041
  %v1102 = vmax.f32 %v1026, %v1037
  %v1103 = vmax.f32 %v1027, %v1041
  %v1104 = vmax.f32 %v1028, %v1037
  %v1105 = vmax.f32 %v1029, %v1041
  %v1106 = vmax.f32 %v1030, %v1037
  %v1107 = vmax.f32 %v1031, %v1041
  %1108 = vst.msk [vmem:[%s10] sm:$0xff] %vm79, %v1044
  %1109 = vst.msk [vmem:[%s10 + $0x8] sm:$0xff] %vm79, %v1046
  %1110 = vst.msk [vmem:[%s10 + $0x10] sm:$0xff] %vm79, %v1048
  %1111 = vst.msk [vmem:[%s10 + $0x18] sm:$0xff] %vm79, %v1050
  %1112 = vst.msk [vmem:[%s10 + $0x20] sm:$0xff] %vm79, %v1052
  %1113 = vst.msk [vmem:[%s10 + $0x28] sm:$0xff] %vm79, %v1054
  %1114 = vst.msk [vmem:[%s10 + $0x30] sm:$0xff] %vm79, %v1056
  %1115 = vst.msk [vmem:[%s10 + $0x38] sm:$0xff] %vm79, %v1058
  %1116 = vst.msk [vmem:[%s10 + $0x40] sm:$0xff] %vm79, %v1060
  %1117 = vst.msk [vmem:[%s10 + $0x48] sm:$0xff] %vm79, %v1062
  %1118 = vst.msk [vmem:[%s10 + $0x50] sm:$0xff] %vm79, %v1064
  %1119 = vst.msk [vmem:[%s10 + $0x58] sm:$0xff] %vm79, %v1066
  %1120 = vst.msk [vmem:[%s10 + $0x60] sm:$0xff] %vm79, %v1068
  %1121 = vst.msk [vmem:[%s10 + $0x68] sm:$0xff] %vm79, %v1070
  %1122 = vst.msk [vmem:[%s10 + $0x70] sm:$0xff] %vm79, %v1072
  %1123 = vst.msk [vmem:[%s10 + $0x78] sm:$0xff] %vm79, %v1074
  %1124 = vst.msk [vmem:[%s10 + $0x80] sm:$0xff] %vm79, %v1076
  %1125 = vst.msk [vmem:[%s10 + $0x88] sm:$0xff] %vm79, %v1078
  %1126 = vst.msk [vmem:[%s10 + $0x90] sm:$0xff] %vm79, %v1080
  %1127 = vst.msk [vmem:[%s10 + $0x98] sm:$0xff] %vm79, %v1082
  %1128 = vst.msk [vmem:[%s10 + $0xa0] sm:$0xff] %vm79, %v1084
  %1129 = vst.msk [vmem:[%s10 + $0xa8] sm:$0xff] %vm79, %v1086
  %1130 = vst.msk [vmem:[%s10 + $0xb0] sm:$0xff] %vm79, %v1088
  %1131 = vst.msk [vmem:[%s10 + $0xb8] sm:$0xff] %vm79, %v1090
  %1132 = vst.msk [vmem:[%s10 + $0xc0] sm:$0xff] %vm79, %v1092
  %1133 = vst.msk [vmem:[%s10 + $0xc8] sm:$0xff] %vm79, %v1094
  %1134 = vst.msk [vmem:[%s10 + $0xd0] sm:$0xff] %vm79, %v1096
  %1135 = vst.msk [vmem:[%s10 + $0xd8] sm:$0xff] %vm79, %v1098
  %1136 = vst.msk [vmem:[%s10 + $0xe0] sm:$0xff] %vm79, %v1100
  %1137 = vst.msk [vmem:[%s10 + $0xe8] sm:$0xff] %vm79, %v1102
  %1138 = vst.msk [vmem:[%s10 + $0xf0] sm:$0xff] %vm79, %v1104
  %1139 = vst.msk [vmem:[%s10 + $0xf8] sm:$0xff] %vm79, %v1106
  %1172 = vrot.lane.b32.xlu0 %v1044, 64
  %v1173 = vpop.permute.xlu0 %1172
  %1174 = vrot.lane.b32.xlu0 %v1046, 64
  %v1175 = vpop.permute.xlu0 %1174
  %1176 = vrot.lane.b32.xlu0 %v1048, 64
  %v1177 = vpop.permute.xlu0 %1176
  %1178 = vrot.lane.b32.xlu0 %v1050, 64
  %v1179 = vpop.permute.xlu0 %1178
  %1180 = vrot.lane.b32.xlu0 %v1052, 64
  %v1181 = vpop.permute.xlu0 %1180
  %1182 = vrot.lane.b32.xlu0 %v1054, 64
  %v1183 = vpop.permute.xlu0 %1182
  %1184 = vrot.lane.b32.xlu0 %v1056, 64
  %v1185 = vpop.permute.xlu0 %1184
  %1186 = vrot.lane.b32.xlu0 %v1058, 64
  %v1187 = vpop.permute.xlu0 %1186
  %1188 = vrot.lane.b32.xlu0 %v1060, 64
  %v1189 = vpop.permute.xlu0 %1188
  %1190 = vrot.lane.b32.xlu0 %v1062, 64
  %v1191 = vpop.permute.xlu0 %1190
  %1192 = vrot.lane.b32.xlu0 %v1064, 64
  %v1193 = vpop.permute.xlu0 %1192
  %1194 = vrot.lane.b32.xlu0 %v1066, 64
  %v1195 = vpop.permute.xlu0 %1194
  %1196 = vrot.lane.b32.xlu0 %v1068, 64
  %v1197 = vpop.permute.xlu0 %1196
  %1198 = vrot.lane.b32.xlu0 %v1070, 64
  %v1199 = vpop.permute.xlu0 %1198
  %1200 = vrot.lane.b32.xlu0 %v1072, 64
  %v1201 = vpop.permute.xlu0 %1200
  %1202 = vrot.lane.b32.xlu0 %v1074, 64
  %v1203 = vpop.permute.xlu0 %1202
  %1204 = vrot.lane.b32.xlu0 %v1076, 64
  %v1205 = vpop.permute.xlu0 %1204
  %1206 = vrot.lane.b32.xlu0 %v1078, 64
  %v1207 = vpop.permute.xlu0 %1206
  %1208 = vrot.lane.b32.xlu0 %v1080, 64
  %v1209 = vpop.permute.xlu0 %1208
  %1210 = vrot.lane.b32.xlu0 %v1082, 64
  %v1211 = vpop.permute.xlu0 %1210
  %1212 = vrot.lane.b32.xlu0 %v1084, 64
  %v1213 = vpop.permute.xlu0 %1212
  %1214 = vrot.lane.b32.xlu0 %v1086, 64
  %v1215 = vpop.permute.xlu0 %1214
  %1216 = vrot.lane.b32.xlu0 %v1088, 64
  %v1217 = vpop.permute.xlu0 %1216
  %1218 = vrot.lane.b32.xlu0 %v1090, 64
  %v1219 = vpop.permute.xlu0 %1218
  %1220 = vrot.lane.b32.xlu0 %v1092, 64
  %v1221 = vpop.permute.xlu0 %1220
  %1222 = vrot.lane.b32.xlu0 %v1094, 64
  %v1223 = vpop.permute.xlu0 %1222
  %1224 = vrot.lane.b32.xlu0 %v1096, 64
  %v1225 = vpop.permute.xlu0 %1224
  %1226 = vrot.lane.b32.xlu0 %v1098, 64
  %v1227 = vpop.permute.xlu0 %1226
  %1228 = vrot.lane.b32.xlu0 %v1100, 64
  %v1229 = vpop.permute.xlu0 %1228
  %1230 = vrot.lane.b32.xlu0 %v1102, 64
  %v1231 = vpop.permute.xlu0 %1230
  %1232 = vrot.lane.b32.xlu0 %v1104, 64
  %v1233 = vpop.permute.xlu0 %1232
  %1234 = vrot.lane.b32.xlu0 %v1106, 64
  %v1235 = vpop.permute.xlu0 %1234
  %1268 = vst.msk [vmem:[%s11] sm:$0xff] %vm79, %v1173
  %1269 = vst.msk [vmem:[%s11 + $0x8] sm:$0xff] %vm79, %v1175
  %1270 = vst.msk [vmem:[%s11 + $0x10] sm:$0xff] %vm79, %v1177
  %1271 = vst.msk [vmem:[%s11 + $0x18] sm:$0xff] %vm79, %v1179
  %1272 = vst.msk [vmem:[%s11 + $0x20] sm:$0xff] %vm79, %v1181
  %1273 = vst.msk [vmem:[%s11 + $0x28] sm:$0xff] %vm79, %v1183
  %1274 = vst.msk [vmem:[%s11 + $0x30] sm:$0xff] %vm79, %v1185
  %1275 = vst.msk [vmem:[%s11 + $0x38] sm:$0xff] %vm79, %v1187
  %1276 = vst.msk [vmem:[%s11 + $0x40] sm:$0xff] %vm79, %v1189
  %1277 = vst.msk [vmem:[%s11 + $0x48] sm:$0xff] %vm79, %v1191
  %1278 = vst.msk [vmem:[%s11 + $0x50] sm:$0xff] %vm79, %v1193
  %1279 = vst.msk [vmem:[%s11 + $0x58] sm:$0xff] %vm79, %v1195
  %1280 = vst.msk [vmem:[%s11 + $0x60] sm:$0xff] %vm79, %v1197
  %1281 = vst.msk [vmem:[%s11 + $0x68] sm:$0xff] %vm79, %v1199
  %1282 = vst.msk [vmem:[%s11 + $0x70] sm:$0xff] %vm79, %v1201
  %1283 = vst.msk [vmem:[%s11 + $0x78] sm:$0xff] %vm79, %v1203
  %1284 = vst.msk [vmem:[%s11 + $0x80] sm:$0xff] %vm79, %v1205
  %1285 = vst.msk [vmem:[%s11 + $0x88] sm:$0xff] %vm79, %v1207
  %1286 = vst.msk [vmem:[%s11 + $0x90] sm:$0xff] %vm79, %v1209
  %1287 = vst.msk [vmem:[%s11 + $0x98] sm:$0xff] %vm79, %v1211
  %1288 = vst.msk [vmem:[%s11 + $0xa0] sm:$0xff] %vm79, %v1213
  %1289 = vst.msk [vmem:[%s11 + $0xa8] sm:$0xff] %vm79, %v1215
  %1290 = vst.msk [vmem:[%s11 + $0xb0] sm:$0xff] %vm79, %v1217
  %1291 = vst.msk [vmem:[%s11 + $0xb8] sm:$0xff] %vm79, %v1219
  %1292 = vst.msk [vmem:[%s11 + $0xc0] sm:$0xff] %vm79, %v1221
  %1293 = vst.msk [vmem:[%s11 + $0xc8] sm:$0xff] %vm79, %v1223
  %1294 = vst.msk [vmem:[%s11 + $0xd0] sm:$0xff] %vm79, %v1225
  %1295 = vst.msk [vmem:[%s11 + $0xd8] sm:$0xff] %vm79, %v1227
  %1296 = vst.msk [vmem:[%s11 + $0xe0] sm:$0xff] %vm79, %v1229
  %1297 = vst.msk [vmem:[%s11 + $0xe8] sm:$0xff] %vm79, %v1231
  %1298 = vst.msk [vmem:[%s11 + $0xf0] sm:$0xff] %vm79, %v1233
  %1299 = vst.msk [vmem:[%s11 + $0xf8] sm:$0xff] %vm79, %v1235
  %1300 = vst.msk [vmem:[%s12] sm:$0xff] %vm79, %v1045
  %1301 = vst.msk [vmem:[%s12 + $0x8] sm:$0xff] %vm79, %v1047
  %1302 = vst.msk [vmem:[%s12 + $0x10] sm:$0xff] %vm79, %v1049
  %1303 = vst.msk [vmem:[%s12 + $0x18] sm:$0xff] %vm79, %v1051
  %1304 = vst.msk [vmem:[%s12 + $0x20] sm:$0xff] %vm79, %v1053
  %1305 = vst.msk [vmem:[%s12 + $0x28] sm:$0xff] %vm79, %v1055
  %1306 = vst.msk [vmem:[%s12 + $0x30] sm:$0xff] %vm79, %v1057
  %1307 = vst.msk [vmem:[%s12 + $0x38] sm:$0xff] %vm79, %v1059
  %1308 = vst.msk [vmem:[%s12 + $0x40] sm:$0xff] %vm79, %v1061
  %1309 = vst.msk [vmem:[%s12 + $0x48] sm:$0xff] %vm79, %v1063
  %1310 = vst.msk [vmem:[%s12 + $0x50] sm:$0xff] %vm79, %v1065
  %1311 = vst.msk [vmem:[%s12 + $0x58] sm:$0xff] %vm79, %v1067
  %1312 = vst.msk [vmem:[%s12 + $0x60] sm:$0xff] %vm79, %v1069
  %1313 = vst.msk [vmem:[%s12 + $0x68] sm:$0xff] %vm79, %v1071
  %1314 = vst.msk [vmem:[%s12 + $0x70] sm:$0xff] %vm79, %v1073
  %1315 = vst.msk [vmem:[%s12 + $0x78] sm:$0xff] %vm79, %v1075
  %1316 = vst.msk [vmem:[%s12 + $0x80] sm:$0xff] %vm79, %v1077
  %1317 = vst.msk [vmem:[%s12 + $0x88] sm:$0xff] %vm79, %v1079
  %1318 = vst.msk [vmem:[%s12 + $0x90] sm:$0xff] %vm79, %v1081
  %1319 = vst.msk [vmem:[%s12 + $0x98] sm:$0xff] %vm79, %v1083
  %1320 = vst.msk [vmem:[%s12 + $0xa0] sm:$0xff] %vm79, %v1085
  %1321 = vst.msk [vmem:[%s12 + $0xa8] sm:$0xff] %vm79, %v1087
  %1322 = vst.msk [vmem:[%s12 + $0xb0] sm:$0xff] %vm79, %v1089
  %1323 = vst.msk [vmem:[%s12 + $0xb8] sm:$0xff] %vm79, %v1091
  %1324 = vst.msk [vmem:[%s12 + $0xc0] sm:$0xff] %vm79, %v1093
  %1325 = vst.msk [vmem:[%s12 + $0xc8] sm:$0xff] %vm79, %v1095
  %1326 = vst.msk [vmem:[%s12 + $0xd0] sm:$0xff] %vm79, %v1097
  %1327 = vst.msk [vmem:[%s12 + $0xd8] sm:$0xff] %vm79, %v1099
  %1328 = vst.msk [vmem:[%s12 + $0xe0] sm:$0xff] %vm79, %v1101
  %1329 = vst.msk [vmem:[%s12 + $0xe8] sm:$0xff] %vm79, %v1103
  %1330 = vst.msk [vmem:[%s12 + $0xf0] sm:$0xff] %vm79, %v1105
  %1331 = vst.msk [vmem:[%s12 + $0xf8] sm:$0xff] %vm79, %v1107
  %v1332 = vld [vmem:[%s1] sm:$0xff]
  %v1333 = vld [vmem:[%s1 + $0x8] sm:$0xff]
  %v1334 = vld [vmem:[%s1 + $0x10] sm:$0xff]
  %v1335 = vld [vmem:[%s1 + $0x18] sm:$0xff]
  %v1336 = vld [vmem:[%s1 + $0x20] sm:$0xff]
  %v1337 = vld [vmem:[%s1 + $0x28] sm:$0xff]
  %v1338 = vld [vmem:[%s1 + $0x30] sm:$0xff]
  %v1339 = vld [vmem:[%s1 + $0x38] sm:$0xff]
  %v1340 = vld [vmem:[%s1 + $0x40] sm:$0xff]
  %v1341 = vld [vmem:[%s1 + $0x48] sm:$0xff]
  %v1342 = vld [vmem:[%s1 + $0x50] sm:$0xff]
  %v1343 = vld [vmem:[%s1 + $0x58] sm:$0xff]
  %v1344 = vld [vmem:[%s1 + $0x60] sm:$0xff]
  %v1345 = vld [vmem:[%s1 + $0x68] sm:$0xff]
  %v1346 = vld [vmem:[%s1 + $0x70] sm:$0xff]
  %v1347 = vld [vmem:[%s1 + $0x78] sm:$0xff]
  %v1348 = vld [vmem:[%s1 + $0x80] sm:$0xff]
  %v1349 = vld [vmem:[%s1 + $0x88] sm:$0xff]
  %v1350 = vld [vmem:[%s1 + $0x90] sm:$0xff]
  %v1351 = vld [vmem:[%s1 + $0x98] sm:$0xff]
  %v1352 = vld [vmem:[%s1 + $0xa0] sm:$0xff]
  %v1353 = vld [vmem:[%s1 + $0xa8] sm:$0xff]
  %v1354 = vld [vmem:[%s1 + $0xb0] sm:$0xff]
  %v1355 = vld [vmem:[%s1 + $0xb8] sm:$0xff]
  %v1356 = vld [vmem:[%s1 + $0xc0] sm:$0xff]
  %v1357 = vld [vmem:[%s1 + $0xc8] sm:$0xff]
  %v1358 = vld [vmem:[%s1 + $0xd0] sm:$0xff]
  %v1359 = vld [vmem:[%s1 + $0xd8] sm:$0xff]
  %v1360 = vld [vmem:[%s1 + $0xe0] sm:$0xff]
  %v1361 = vld [vmem:[%s1 + $0xe8] sm:$0xff]
  %v1362 = vld [vmem:[%s1 + $0xf0] sm:$0xff]
  %v1363 = vld [vmem:[%s1 + $0xf8] sm:$0xff]
  %v1364 = vld [vmem:[%s9] sm:$0x7]
  %1366 = vset.pattern.permute.xlu0 0
  %1367 = vperm.xlu0 %1366, %v1332
  %v1368 = vpop.permute.xlu0 %1367
  %1371 = vset.pattern.permute.xlu0 0
  %1372 = vperm.xlu0 %1371, %v1333
  %v1373 = vpop.permute.xlu0 %1372
  %1376 = vset.pattern.permute.xlu0 0
  %1377 = vperm.xlu0 %1376, %v1334
  %v1378 = vpop.permute.xlu0 %1377
  %1381 = vset.pattern.permute.xlu0 0
  %1382 = vperm.xlu0 %1381, %v1335
  %v1383 = vpop.permute.xlu0 %1382
  %1386 = vset.pattern.permute.xlu0 0
  %1387 = vperm.xlu0 %1386, %v1336
  %v1388 = vpop.permute.xlu0 %1387
  %1391 = vset.pattern.permute.xlu0 0
  %1392 = vperm.xlu0 %1391, %v1337
  %v1393 = vpop.permute.xlu0 %1392
  %1396 = vset.pattern.permute.xlu0 0
  %1397 = vperm.xlu0 %1396, %v1338
  %v1398 = vpop.permute.xlu0 %1397
  %1401 = vset.pattern.permute.xlu0 0
  %1402 = vperm.xlu0 %1401, %v1339
  %v1403 = vpop.permute.xlu0 %1402
  %1406 = vset.pattern.permute.xlu0 0
  %1407 = vperm.xlu0 %1406, %v1340
  %v1408 = vpop.permute.xlu0 %1407
  %1411 = vset.pattern.permute.xlu0 0
  %1412 = vperm.xlu0 %1411, %v1341
  %v1413 = vpop.permute.xlu0 %1412
  %1416 = vset.pattern.permute.xlu0 0
  %1417 = vperm.xlu0 %1416, %v1342
  %v1418 = vpop.permute.xlu0 %1417
  %1421 = vset.pattern.permute.xlu0 0
  %1422 = vperm.xlu0 %1421, %v1343
  %v1423 = vpop.permute.xlu0 %1422
  %1426 = vset.pattern.permute.xlu0 0
  %1427 = vperm.xlu0 %1426, %v1344
  %v1428 = vpop.permute.xlu0 %1427
  %1431 = vset.pattern.permute.xlu0 0
  %1432 = vperm.xlu0 %1431, %v1345
  %v1433 = vpop.permute.xlu0 %1432
  %1436 = vset.pattern.permute.xlu0 0
  %1437 = vperm.xlu0 %1436, %v1346
  %v1438 = vpop.permute.xlu0 %1437
  %1441 = vset.pattern.permute.xlu0 0
  %1442 = vperm.xlu0 %1441, %v1347
  %v1443 = vpop.permute.xlu0 %1442
  %1446 = vset.pattern.permute.xlu0 0
  %1447 = vperm.xlu0 %1446, %v1348
  %v1448 = vpop.permute.xlu0 %1447
  %1451 = vset.pattern.permute.xlu0 0
  %1452 = vperm.xlu0 %1451, %v1349
  %v1453 = vpop.permute.xlu0 %1452
  %1456 = vset.pattern.permute.xlu0 0
  %1457 = vperm.xlu0 %1456, %v1350
  %v1458 = vpop.permute.xlu0 %1457
  %1461 = vset.pattern.permute.xlu0 0
  %1462 = vperm.xlu0 %1461, %v1351
  %v1463 = vpop.permute.xlu0 %1462
  %1466 = vset.pattern.permute.xlu0 0
  %1467 = vperm.xlu0 %1466, %v1352
  %v1468 = vpop.permute.xlu0 %1467
  %1471 = vset.pattern.permute.xlu0 0
  %1472 = vperm.xlu0 %1471, %v1353
  %v1473 = vpop.permute.xlu0 %1472
  %1476 = vset.pattern.permute.xlu0 0
  %1477 = vperm.xlu0 %1476, %v1354
  %v1478 = vpop.permute.xlu0 %1477
  %1481 = vset.pattern.permute.xlu0 0
  %1482 = vperm.xlu0 %1481, %v1355
  %v1483 = vpop.permute.xlu0 %1482
  %1486 = vset.pattern.permute.xlu0 0
  %1487 = vperm.xlu0 %1486, %v1356
  %v1488 = vpop.permute.xlu0 %1487
  %1491 = vset.pattern.permute.xlu0 0
  %1492 = vperm.xlu0 %1491, %v1357
  %v1493 = vpop.permute.xlu0 %1492
  %1496 = vset.pattern.permute.xlu0 0
  %1497 = vperm.xlu0 %1496, %v1358
  %v1498 = vpop.permute.xlu0 %1497
  %1501 = vset.pattern.permute.xlu0 0
  %1502 = vperm.xlu0 %1501, %v1359
  %v1503 = vpop.permute.xlu0 %1502
  %1506 = vset.pattern.permute.xlu0 0
  %1507 = vperm.xlu0 %1506, %v1360
  %v1508 = vpop.permute.xlu0 %1507
  %1511 = vset.pattern.permute.xlu0 0
  %1512 = vperm.xlu0 %1511, %v1361
  %v1513 = vpop.permute.xlu0 %1512
  %1516 = vset.pattern.permute.xlu0 0
  %1517 = vperm.xlu0 %1516, %v1362
  %v1518 = vpop.permute.xlu0 %1517
  %1521 = vset.pattern.permute.xlu0 0
  %1522 = vperm.xlu0 %1521, %v1363
  %v1523 = vpop.permute.xlu0 %1522
  %v1525 = vlaneseq
  %v1526 = vshrl.u32 %v1525, 7
  %v1527 = vsub.s32 0, %v1526
  %v1528 = vrot.slane %v1364, %v1527
  %v1529 = vmul.f32 %v1368, %v1528
  %v1530 = vmul.f32 %v1373, %v1528
  %v1531 = vmul.f32 %v1378, %v1528
  %v1532 = vmul.f32 %v1383, %v1528
  %v1533 = vmul.f32 %v1388, %v1528
  %v1534 = vmul.f32 %v1393, %v1528
  %v1535 = vmul.f32 %v1398, %v1528
  %v1536 = vmul.f32 %v1403, %v1528
  %v1537 = vmul.f32 %v1408, %v1528
  %v1538 = vmul.f32 %v1413, %v1528
  %v1539 = vmul.f32 %v1418, %v1528
  %v1540 = vmul.f32 %v1423, %v1528
  %v1541 = vmul.f32 %v1428, %v1528
  %v1542 = vmul.f32 %v1433, %v1528
  %v1543 = vmul.f32 %v1438, %v1528
  %v1544 = vmul.f32 %v1443, %v1528
  %v1545 = vmul.f32 %v1448, %v1528
  %v1546 = vmul.f32 %v1453, %v1528
  %v1547 = vmul.f32 %v1458, %v1528
  %v1548 = vmul.f32 %v1463, %v1528
  %v1549 = vmul.f32 %v1468, %v1528
  %v1550 = vmul.f32 %v1473, %v1528
  %v1551 = vmul.f32 %v1478, %v1528
  %v1552 = vmul.f32 %v1483, %v1528
  %v1553 = vmul.f32 %v1488, %v1528
  %v1554 = vmul.f32 %v1493, %v1528
  %v1555 = vmul.f32 %v1498, %v1528
  %v1556 = vmul.f32 %v1503, %v1528
  %v1557 = vmul.f32 %v1508, %v1528
  %v1558 = vmul.f32 %v1513, %v1528
  %v1559 = vmul.f32 %v1518, %v1528
  %v1560 = vmul.f32 %v1523, %v1528
  %1561 = vset.pattern.permute.xlu0 1
  %1562 = vperm.xlu0 %1561, %v1332
  %v1563 = vpop.permute.xlu0 %1562
  %1565 = vset.pattern.permute.xlu0 1
  %1566 = vperm.xlu0 %1565, %v1333
  %v1567 = vpop.permute.xlu0 %1566
  %1569 = vset.pattern.permute.xlu0 1
  %1570 = vperm.xlu0 %1569, %v1334
  %v1571 = vpop.permute.xlu0 %1570
  %1573 = vset.pattern.permute.xlu0 1
  %1574 = vperm.xlu0 %1573, %v1335
  %v1575 = vpop.permute.xlu0 %1574
  %1577 = vset.pattern.permute.xlu0 1
  %1578 = vperm.xlu0 %1577, %v1336
  %v1579 = vpop.permute.xlu0 %1578
  %1581 = vset.pattern.permute.xlu0 1
  %1582 = vperm.xlu0 %1581, %v1337
  %v1583 = vpop.permute.xlu0 %1582
  %1585 = vset.pattern.permute.xlu0 1
  %1586 = vperm.xlu0 %1585, %v1338
  %v1587 = vpop.permute.xlu0 %1586
  %1589 = vset.pattern.permute.xlu0 1
  %1590 = vperm.xlu0 %1589, %v1339
  %v1591 = vpop.permute.xlu0 %1590
  %1593 = vset.pattern.permute.xlu0 1
  %1594 = vperm.xlu0 %1593, %v1340
  %v1595 = vpop.permute.xlu0 %1594
  %1597 = vset.pattern.permute.xlu0 1
  %1598 = vperm.xlu0 %1597, %v1341
  %v1599 = vpop.permute.xlu0 %1598
  %1601 = vset.pattern.permute.xlu0 1
  %1602 = vperm.xlu0 %1601, %v1342
  %v1603 = vpop.permute.xlu0 %1602
  %1605 = vset.pattern.permute.xlu0 1
  %1606 = vperm.xlu0 %1605, %v1343
  %v1607 = vpop.permute.xlu0 %1606
  %1609 = vset.pattern.permute.xlu0 1
  %1610 = vperm.xlu0 %1609, %v1344
  %v1611 = vpop.permute.xlu0 %1610
  %1613 = vset.pattern.permute.xlu0 1
  %1614 = vperm.xlu0 %1613, %v1345
  %v1615 = vpop.permute.xlu0 %1614
  %1617 = vset.pattern.permute.xlu0 1
  %1618 = vperm.xlu0 %1617, %v1346
  %v1619 = vpop.permute.xlu0 %1618
  %1621 = vset.pattern.permute.xlu0 1
  %1622 = vperm.xlu0 %1621, %v1347
  %v1623 = vpop.permute.xlu0 %1622
  %1625 = vset.pattern.permute.xlu0 1
  %1626 = vperm.xlu0 %1625, %v1348
  %v1627 = vpop.permute.xlu0 %1626
  %1629 = vset.pattern.permute.xlu0 1
  %1630 = vperm.xlu0 %1629, %v1349
  %v1631 = vpop.permute.xlu0 %1630
  %1633 = vset.pattern.permute.xlu0 1
  %1634 = vperm.xlu0 %1633, %v1350
  %v1635 = vpop.permute.xlu0 %1634
  %1637 = vset.pattern.permute.xlu0 1
  %1638 = vperm.xlu0 %1637, %v1351
  %v1639 = vpop.permute.xlu0 %1638
  %1641 = vset.pattern.permute.xlu0 1
  %1642 = vperm.xlu0 %1641, %v1352
  %v1643 = vpop.permute.xlu0 %1642
  %1645 = vset.pattern.permute.xlu0 1
  %1646 = vperm.xlu0 %1645, %v1353
  %v1647 = vpop.permute.xlu0 %1646
  %1649 = vset.pattern.permute.xlu0 1
  %1650 = vperm.xlu0 %1649, %v1354
  %v1651 = vpop.permute.xlu0 %1650
  %1653 = vset.pattern.permute.xlu0 1
  %1654 = vperm.xlu0 %1653, %v1355
  %v1655 = vpop.permute.xlu0 %1654
  %1657 = vset.pattern.permute.xlu0 1
  %1658 = vperm.xlu0 %1657, %v1356
  %v1659 = vpop.permute.xlu0 %1658
  %1661 = vset.pattern.permute.xlu0 1
  %1662 = vperm.xlu0 %1661, %v1357
  %v1663 = vpop.permute.xlu0 %1662
  %1665 = vset.pattern.permute.xlu0 1
  %1666 = vperm.xlu0 %1665, %v1358
  %v1667 = vpop.permute.xlu0 %1666
  %1669 = vset.pattern.permute.xlu0 1
  %1670 = vperm.xlu0 %1669, %v1359
  %v1671 = vpop.permute.xlu0 %1670
  %1673 = vset.pattern.permute.xlu0 1
  %1674 = vperm.xlu0 %1673, %v1360
  %v1675 = vpop.permute.xlu0 %1674
  %1677 = vset.pattern.permute.xlu0 1
  %1678 = vperm.xlu0 %1677, %v1361
  %v1679 = vpop.permute.xlu0 %1678
  %1681 = vset.pattern.permute.xlu0 1
  %1682 = vperm.xlu0 %1681, %v1362
  %v1683 = vpop.permute.xlu0 %1682
  %1685 = vset.pattern.permute.xlu0 1
  %1686 = vperm.xlu0 %1685, %v1363
  %v1687 = vpop.permute.xlu0 %1686
  %v1689 = vlaneseq
  %v1690 = vshrl.u32 %v1689, 7
  %v1691 = vsub.s32 1, %v1690
  %v1692 = vrot.slane %v1364, %v1691
  %v1693 = vmul.f32 %v1563, %v1692
  %v1694 = vmul.f32 %v1567, %v1692
  %v1695 = vmul.f32 %v1571, %v1692
  %v1696 = vmul.f32 %v1575, %v1692
  %v1697 = vmul.f32 %v1579, %v1692
  %v1698 = vmul.f32 %v1583, %v1692
  %v1699 = vmul.f32 %v1587, %v1692
  %v1700 = vmul.f32 %v1591, %v1692
  %v1701 = vmul.f32 %v1595, %v1692
  %v1702 = vmul.f32 %v1599, %v1692
  %v1703 = vmul.f32 %v1603, %v1692
  %v1704 = vmul.f32 %v1607, %v1692
  %v1705 = vmul.f32 %v1611, %v1692
  %v1706 = vmul.f32 %v1615, %v1692
  %v1707 = vmul.f32 %v1619, %v1692
  %v1708 = vmul.f32 %v1623, %v1692
  %v1709 = vmul.f32 %v1627, %v1692
  %v1710 = vmul.f32 %v1631, %v1692
  %v1711 = vmul.f32 %v1635, %v1692
  %v1712 = vmul.f32 %v1639, %v1692
  %v1713 = vmul.f32 %v1643, %v1692
  %v1714 = vmul.f32 %v1647, %v1692
  %v1715 = vmul.f32 %v1651, %v1692
  %v1716 = vmul.f32 %v1655, %v1692
  %v1717 = vmul.f32 %v1659, %v1692
  %v1718 = vmul.f32 %v1663, %v1692
  %v1719 = vmul.f32 %v1667, %v1692
  %v1720 = vmul.f32 %v1671, %v1692
  %v1721 = vmul.f32 %v1675, %v1692
  %v1722 = vmul.f32 %v1679, %v1692
  %v1723 = vmul.f32 %v1683, %v1692
  %v1724 = vmul.f32 %v1687, %v1692
  %v1725 = vadd.f32 %v1529, %v1693
  %v1726 = vadd.f32 %v1530, %v1694
  %v1727 = vadd.f32 %v1531, %v1695
  %v1728 = vadd.f32 %v1532, %v1696
  %v1729 = vadd.f32 %v1533, %v1697
  %v1730 = vadd.f32 %v1534, %v1698
  %v1731 = vadd.f32 %v1535, %v1699
  %v1732 = vadd.f32 %v1536, %v1700
  %v1733 = vadd.f32 %v1537, %v1701
  %v1734 = vadd.f32 %v1538, %v1702
  %v1735 = vadd.f32 %v1539, %v1703
  %v1736 = vadd.f32 %v1540, %v1704
  %v1737 = vadd.f32 %v1541, %v1705
  %v1738 = vadd.f32 %v1542, %v1706
  %v1739 = vadd.f32 %v1543, %v1707
  %v1740 = vadd.f32 %v1544, %v1708
  %v1741 = vadd.f32 %v1545, %v1709
  %v1742 = vadd.f32 %v1546, %v1710
  %v1743 = vadd.f32 %v1547, %v1711
  %v1744 = vadd.f32 %v1548, %v1712
  %v1745 = vadd.f32 %v1549, %v1713
  %v1746 = vadd.f32 %v1550, %v1714
  %v1747 = vadd.f32 %v1551, %v1715
  %v1748 = vadd.f32 %v1552, %v1716
  %v1749 = vadd.f32 %v1553, %v1717
  %v1750 = vadd.f32 %v1554, %v1718
  %v1751 = vadd.f32 %v1555, %v1719
  %v1752 = vadd.f32 %v1556, %v1720
  %v1753 = vadd.f32 %v1557, %v1721
  %v1754 = vadd.f32 %v1558, %v1722
  %v1755 = vadd.f32 %v1559, %v1723
  %v1756 = vadd.f32 %v1560, %v1724
  %1757 = vset.pattern.permute.xlu0 2
  %1758 = vperm.xlu0 %1757, %v1332
  %v1759 = vpop.permute.xlu0 %1758
  %1761 = vset.pattern.permute.xlu0 2
  %1762 = vperm.xlu0 %1761, %v1333
  %v1763 = vpop.permute.xlu0 %1762
  %1765 = vset.pattern.permute.xlu0 2
  %1766 = vperm.xlu0 %1765, %v1334
  %v1767 = vpop.permute.xlu0 %1766
  %1769 = vset.pattern.permute.xlu0 2
  %1770 = vperm.xlu0 %1769, %v1335
  %v1771 = vpop.permute.xlu0 %1770
  %1773 = vset.pattern.permute.xlu0 2
  %1774 = vperm.xlu0 %1773, %v1336
  %v1775 = vpop.permute.xlu0 %1774
  %1777 = vset.pattern.permute.xlu0 2
  %1778 = vperm.xlu0 %1777, %v1337
  %v1779 = vpop.permute.xlu0 %1778
  %1781 = vset.pattern.permute.xlu0 2
  %1782 = vperm.xlu0 %1781, %v1338
  %v1783 = vpop.permute.xlu0 %1782
  %1785 = vset.pattern.permute.xlu0 2
  %1786 = vperm.xlu0 %1785, %v1339
  %v1787 = vpop.permute.xlu0 %1786
  %1789 = vset.pattern.permute.xlu0 2
  %1790 = vperm.xlu0 %1789, %v1340
  %v1791 = vpop.permute.xlu0 %1790
  %1793 = vset.pattern.permute.xlu0 2
  %1794 = vperm.xlu0 %1793, %v1341
  %v1795 = vpop.permute.xlu0 %1794
  %1797 = vset.pattern.permute.xlu0 2
  %1798 = vperm.xlu0 %1797, %v1342
  %v1799 = vpop.permute.xlu0 %1798
  %1801 = vset.pattern.permute.xlu0 2
  %1802 = vperm.xlu0 %1801, %v1343
  %v1803 = vpop.permute.xlu0 %1802
  %1805 = vset.pattern.permute.xlu0 2
  %1806 = vperm.xlu0 %1805, %v1344
  %v1807 = vpop.permute.xlu0 %1806
  %1809 = vset.pattern.permute.xlu0 2
  %1810 = vperm.xlu0 %1809, %v1345
  %v1811 = vpop.permute.xlu0 %1810
  %1813 = vset.pattern.permute.xlu0 2
  %1814 = vperm.xlu0 %1813, %v1346
  %v1815 = vpop.permute.xlu0 %1814
  %1817 = vset.pattern.permute.xlu0 2
  %1818 = vperm.xlu0 %1817, %v1347
  %v1819 = vpop.permute.xlu0 %1818
  %1821 = vset.pattern.permute.xlu0 2
  %1822 = vperm.xlu0 %1821, %v1348
  %v1823 = vpop.permute.xlu0 %1822
  %1825 = vset.pattern.permute.xlu0 2
  %1826 = vperm.xlu0 %1825, %v1349
  %v1827 = vpop.permute.xlu0 %1826
  %1829 = vset.pattern.permute.xlu0 2
  %1830 = vperm.xlu0 %1829, %v1350
  %v1831 = vpop.permute.xlu0 %1830
  %1833 = vset.pattern.permute.xlu0 2
  %1834 = vperm.xlu0 %1833, %v1351
  %v1835 = vpop.permute.xlu0 %1834
  %1837 = vset.pattern.permute.xlu0 2
  %1838 = vperm.xlu0 %1837, %v1352
  %v1839 = vpop.permute.xlu0 %1838
  %1841 = vset.pattern.permute.xlu0 2
  %1842 = vperm.xlu0 %1841, %v1353
  %v1843 = vpop.permute.xlu0 %1842
  %1845 = vset.pattern.permute.xlu0 2
  %1846 = vperm.xlu0 %1845, %v1354
  %v1847 = vpop.permute.xlu0 %1846
  %1849 = vset.pattern.permute.xlu0 2
  %1850 = vperm.xlu0 %1849, %v1355
  %v1851 = vpop.permute.xlu0 %1850
  %1853 = vset.pattern.permute.xlu0 2
  %1854 = vperm.xlu0 %1853, %v1356
  %v1855 = vpop.permute.xlu0 %1854
  %1857 = vset.pattern.permute.xlu0 2
  %1858 = vperm.xlu0 %1857, %v1357
  %v1859 = vpop.permute.xlu0 %1858
  %1861 = vset.pattern.permute.xlu0 2
  %1862 = vperm.xlu0 %1861, %v1358
  %v1863 = vpop.permute.xlu0 %1862
  %1865 = vset.pattern.permute.xlu0 2
  %1866 = vperm.xlu0 %1865, %v1359
  %v1867 = vpop.permute.xlu0 %1866
  %1869 = vset.pattern.permute.xlu0 2
  %1870 = vperm.xlu0 %1869, %v1360
  %v1871 = vpop.permute.xlu0 %1870
  %1873 = vset.pattern.permute.xlu0 2
  %1874 = vperm.xlu0 %1873, %v1361
  %v1875 = vpop.permute.xlu0 %1874
  %1877 = vset.pattern.permute.xlu0 2
  %1878 = vperm.xlu0 %1877, %v1362
  %v1879 = vpop.permute.xlu0 %1878
  %1881 = vset.pattern.permute.xlu0 2
  %1882 = vperm.xlu0 %1881, %v1363
  %v1883 = vpop.permute.xlu0 %1882
  %v1885 = vlaneseq
  %v1886 = vshrl.u32 %v1885, 7
  %v1887 = vsub.s32 2, %v1886
  %v1888 = vrot.slane %v1364, %v1887
  %v1889 = vmul.f32 %v1759, %v1888
  %v1890 = vmul.f32 %v1763, %v1888
  %v1891 = vmul.f32 %v1767, %v1888
  %v1892 = vmul.f32 %v1771, %v1888
  %v1893 = vmul.f32 %v1775, %v1888
  %v1894 = vmul.f32 %v1779, %v1888
  %v1895 = vmul.f32 %v1783, %v1888
  %v1896 = vmul.f32 %v1787, %v1888
  %v1897 = vmul.f32 %v1791, %v1888
  %v1898 = vmul.f32 %v1795, %v1888
  %v1899 = vmul.f32 %v1799, %v1888
  %v1900 = vmul.f32 %v1803, %v1888
  %v1901 = vmul.f32 %v1807, %v1888
  %v1902 = vmul.f32 %v1811, %v1888
  %v1903 = vmul.f32 %v1815, %v1888
  %v1904 = vmul.f32 %v1819, %v1888
  %v1905 = vmul.f32 %v1823, %v1888
  %v1906 = vmul.f32 %v1827, %v1888
  %v1907 = vmul.f32 %v1831, %v1888
  %v1908 = vmul.f32 %v1835, %v1888
  %v1909 = vmul.f32 %v1839, %v1888
  %v1910 = vmul.f32 %v1843, %v1888
  %v1911 = vmul.f32 %v1847, %v1888
  %v1912 = vmul.f32 %v1851, %v1888
  %v1913 = vmul.f32 %v1855, %v1888
  %v1914 = vmul.f32 %v1859, %v1888
  %v1915 = vmul.f32 %v1863, %v1888
  %v1916 = vmul.f32 %v1867, %v1888
  %v1917 = vmul.f32 %v1871, %v1888
  %v1918 = vmul.f32 %v1875, %v1888
  %v1919 = vmul.f32 %v1879, %v1888
  %v1920 = vmul.f32 %v1883, %v1888
  %v1921 = vadd.f32 %v1725, %v1889
  %v1922 = vadd.f32 %v1726, %v1890
  %v1923 = vadd.f32 %v1727, %v1891
  %v1924 = vadd.f32 %v1728, %v1892
  %v1925 = vadd.f32 %v1729, %v1893
  %v1926 = vadd.f32 %v1730, %v1894
  %v1927 = vadd.f32 %v1731, %v1895
  %v1928 = vadd.f32 %v1732, %v1896
  %v1929 = vadd.f32 %v1733, %v1897
  %v1930 = vadd.f32 %v1734, %v1898
  %v1931 = vadd.f32 %v1735, %v1899
  %v1932 = vadd.f32 %v1736, %v1900
  %v1933 = vadd.f32 %v1737, %v1901
  %v1934 = vadd.f32 %v1738, %v1902
  %v1935 = vadd.f32 %v1739, %v1903
  %v1936 = vadd.f32 %v1740, %v1904
  %v1937 = vadd.f32 %v1741, %v1905
  %v1938 = vadd.f32 %v1742, %v1906
  %v1939 = vadd.f32 %v1743, %v1907
  %v1940 = vadd.f32 %v1744, %v1908
  %v1941 = vadd.f32 %v1745, %v1909
  %v1942 = vadd.f32 %v1746, %v1910
  %v1943 = vadd.f32 %v1747, %v1911
  %v1944 = vadd.f32 %v1748, %v1912
  %v1945 = vadd.f32 %v1749, %v1913
  %v1946 = vadd.f32 %v1750, %v1914
  %v1947 = vadd.f32 %v1751, %v1915
  %v1948 = vadd.f32 %v1752, %v1916
  %v1949 = vadd.f32 %v1753, %v1917
  %v1950 = vadd.f32 %v1754, %v1918
  %v1951 = vadd.f32 %v1755, %v1919
  %v1952 = vadd.f32 %v1756, %v1920
  %1953 = vst.msk [vmem:[%s13] sm:$0xff] %vm79, %v1921
  %1954 = vst.msk [vmem:[%s13 + $0x8] sm:$0xff] %vm79, %v1922
  %1955 = vst.msk [vmem:[%s13 + $0x10] sm:$0xff] %vm79, %v1923
  %1956 = vst.msk [vmem:[%s13 + $0x18] sm:$0xff] %vm79, %v1924
  %1957 = vst.msk [vmem:[%s13 + $0x20] sm:$0xff] %vm79, %v1925
  %1958 = vst.msk [vmem:[%s13 + $0x28] sm:$0xff] %vm79, %v1926
  %1959 = vst.msk [vmem:[%s13 + $0x30] sm:$0xff] %vm79, %v1927
  %1960 = vst.msk [vmem:[%s13 + $0x38] sm:$0xff] %vm79, %v1928
  %1961 = vst.msk [vmem:[%s13 + $0x40] sm:$0xff] %vm79, %v1929
  %1962 = vst.msk [vmem:[%s13 + $0x48] sm:$0xff] %vm79, %v1930
  %1963 = vst.msk [vmem:[%s13 + $0x50] sm:$0xff] %vm79, %v1931
  %1964 = vst.msk [vmem:[%s13 + $0x58] sm:$0xff] %vm79, %v1932
  %1965 = vst.msk [vmem:[%s13 + $0x60] sm:$0xff] %vm79, %v1933
  %1966 = vst.msk [vmem:[%s13 + $0x68] sm:$0xff] %vm79, %v1934
  %1967 = vst.msk [vmem:[%s13 + $0x70] sm:$0xff] %vm79, %v1935
  %1968 = vst.msk [vmem:[%s13 + $0x78] sm:$0xff] %vm79, %v1936
  %1969 = vst.msk [vmem:[%s13 + $0x80] sm:$0xff] %vm79, %v1937
  %1970 = vst.msk [vmem:[%s13 + $0x88] sm:$0xff] %vm79, %v1938
  %1971 = vst.msk [vmem:[%s13 + $0x90] sm:$0xff] %vm79, %v1939
  %1972 = vst.msk [vmem:[%s13 + $0x98] sm:$0xff] %vm79, %v1940
  %1973 = vst.msk [vmem:[%s13 + $0xa0] sm:$0xff] %vm79, %v1941
  %1974 = vst.msk [vmem:[%s13 + $0xa8] sm:$0xff] %vm79, %v1942
  %1975 = vst.msk [vmem:[%s13 + $0xb0] sm:$0xff] %vm79, %v1943
  %1976 = vst.msk [vmem:[%s13 + $0xb8] sm:$0xff] %vm79, %v1944
  %1977 = vst.msk [vmem:[%s13 + $0xc0] sm:$0xff] %vm79, %v1945
  %1978 = vst.msk [vmem:[%s13 + $0xc8] sm:$0xff] %vm79, %v1946
  %1979 = vst.msk [vmem:[%s13 + $0xd0] sm:$0xff] %vm79, %v1947
  %1980 = vst.msk [vmem:[%s13 + $0xd8] sm:$0xff] %vm79, %v1948
  %1981 = vst.msk [vmem:[%s13 + $0xe0] sm:$0xff] %vm79, %v1949
  %1982 = vst.msk [vmem:[%s13 + $0xe8] sm:$0xff] %vm79, %v1950
  %1983 = vst.msk [vmem:[%s13 + $0xf0] sm:$0xff] %vm79, %v1951
  %1984 = vst.msk [vmem:[%s13 + $0xf8] sm:$0xff] %vm79, %v1952
  // Predicated region
  $region42: #{tpu_custom_call.1} parent=0 // pred_check
    _
  $region43: #{tpu_custom_call.1} parent=0 // pred_check_branch
    %1986 = sbr.rel (0) target = $region45
  $region44: #{tpu_custom_call.1} parent=0 // pred_region
    _
  $region45: #{tpu_custom_call.1} parent=0 // pred_fallthru
    _
  // Predicated region
  $region46: #{tpu_custom_call.1} parent=0 // pred_check
    _
  $region47: #{tpu_custom_call.1} parent=0 // pred_check_branch
    %1988 = sbr.rel (0) target = $region49
  $region48: #{tpu_custom_call.1} parent=0 // pred_region
    _
  $region49: #{tpu_custom_call.1} parent=0 // pred_fallthru
    _
  // Predicated region
  $region50: #{tpu_custom_call.1} parent=0 // pred_check
    _
  $region51: #{tpu_custom_call.1} parent=0 // pred_check_branch
    %1990 = sbr.rel (0) target = $region53
  $region52: #{tpu_custom_call.1} parent=0 // pred_region
    _
  $region53: #{tpu_custom_call.1} parent=0 // pred_fallthru
    _
  // Predicated region
  $region54: #{tpu_custom_call.1} parent=0 // pred_check
    _
  $region55: #{tpu_custom_call.1} parent=0 // pred_check_branch
    %1992 = sbr.rel (0) target = $region57
  $region56: #{tpu_custom_call.1} parent=0 // pred_region
    _
  $region57: #{tpu_custom_call.1} parent=0 // pred_fallthru
    _
  // Predicated region
  $region58: #{tpu_custom_call.1} parent=0 // pred_check
    _
  $region59: #{tpu_custom_call.1} parent=0 // pred_check_branch
    %1994 = sbr.rel (0) target = $region61
  $region60: #{tpu_custom_call.1} parent=0 // pred_region
    _
  $region61: #{tpu_custom_call.1} parent=0 // pred_fallthru
    _
  // Predicated region
  $region62: #{tpu_custom_call.1} parent=0 // pred_check
    _
  $region63: #{tpu_custom_call.1} parent=0 // pred_check_branch
    %1996 = sbr.rel (0) target = $region65
  $region64: #{tpu_custom_call.1} parent=0 // pred_region
    _
  $region65: #{tpu_custom_call.1} parent=0 // pred_fallthru
    _
  // Predicated region
  $region66: #{tpu_custom_call.1} parent=0 // pred_check
    _
  $region67: #{tpu_custom_call.1} parent=0 // pred_check_branch
    %1998 = sbr.rel (0) target = $region69
  $region68: #{tpu_custom_call.1} parent=0 // pred_region
    _
  $region69: #{tpu_custom_call.1} parent=0 // pred_fallthru
    _
  // Predicated region
  $region70: #{tpu_custom_call.1} parent=0 // pred_check
    _
  $region71: #{tpu_custom_call.1} parent=0 // pred_check_branch
    %2000 = sbr.rel (0) target = $region73
  $region72: #{tpu_custom_call.1} parent=0 // pred_region
    _
  $region73: #{tpu_custom_call.1} parent=0 // pred_fallthru
    _

</llo_original>
